<compile_context>
chip_gen: v6e
topology: v6e:2x2x1
jax: 0.10.0
libtpu: 0.0.40
codegen_flags: <defaults>
</compile_context>

<pallas_src>
import jax
import jax.numpy as jnp
from jax import lax
from jax.experimental import pallas as pl
from jax.experimental.pallas import tpu as pltpu


def _round_up(x, m):
    return ((x + m - 1) // m) * m


# ----------------------------------------------------------------------------
# Fused kernel: one roi tile = head_fc (matmul + bias + ReLU) -> rank scores.
# ----------------------------------------------------------------------------
def _ltr_kernel(head_ref, w_ref, b_ref, sent_ref, rankw_ref, out_ref):
    bf16 = jnp.bfloat16
    # head_fc: (TR, K) f32 -> bf16 on the fly, full-K contraction, f32 acc.
    mapped = jnp.dot(head_ref[...].astype(bf16), w_ref[...],
                     preferred_element_type=jnp.float32)           # (TR, Dp)
    # bias + ReLU in f32.
    mapped = jnp.maximum(mapped + b_ref[...], 0.0)
    # rank_fc (no bias): score = (sent * w_rank) @ mapped^T on the MXU, bf16 in.
    sent_scaled = (sent_ref[...] * rankw_ref[...]).astype(bf16)    # (S, Dp)
    out_ref[...] = lax.dot_general(
        sent_scaled, mapped.astype(bf16),
        dimension_numbers=(((1,), (1,)), ((), ())),
        preferred_element_type=jnp.float32)                        # (S, TR)


# ----------------------------------------------------------------------------
# Parameter prep (call ONCE at load time; reuse across forward calls).
# ----------------------------------------------------------------------------
def prepare_ltr_params(params):
    """Pad to lane width and cast the head_fc weight to bf16, once.

    params:
      "head_fc_w": (2048, D)  -- torch weight (D, 2048) transposed
      "head_fc_b": (D,)
      "rank_fc_w": (D,)       -- torch rank_fc weight (1, D) squeezed, no bias
    """
    w_h = params["head_fc_w"]
    b_h = params["head_fc_b"]
    w_r = params["rank_fc_w"]
    K, D = w_h.shape
    Dp = _round_up(D, 128)
    f32, bf16 = jnp.float32, jnp.bfloat16
    # Zero padding of the D columns leaves mapped/scores exactly unchanged
    # (zero weight, zero bias, zero rank weight in the padded lanes).
    w_p = jnp.zeros((K, Dp), bf16).at[:, :D].set(w_h.astype(bf16))
    b_p = jnp.zeros((1, Dp), f32).at[0, :D].set(b_h.astype(f32))
    r_p = jnp.zeros((1, Dp), f32).at[0, :D].set(w_r.astype(f32))
    return {"head_fc_w_bf16": w_p, "head_fc_b": b_p, "rank_fc_w": r_p}


# ----------------------------------------------------------------------------
# Forward pass.
# ----------------------------------------------------------------------------
def ltr_forward(prepared, sent_feat, head_feat):
    """Returns rank_score: (sent_num, roi_num) float32."""
    w_p = prepared["head_fc_w_bf16"]      # (K, Dp) bf16
    b_p = prepared["head_fc_b"]           # (1, Dp) f32
    r_p = prepared["rank_fc_w"]           # (1, Dp) f32
    K, Dp = w_p.shape
    R, Kh = head_feat.shape
    S, D = sent_feat.shape
    assert Kh == K and D <= Dp, (head_feat.shape, sent_feat.shape, w_p.shape)

    # Roi tile size: don't pad tiny roi counts up to 128; >=2 tiles for mid-size
    # (megacore on v7x); 256 for large R to fill the 256-wide MXU on v6e/v7x
    # while keeping the f32 head double buffer (2 x TR x 2048 x 4B) small.
    if R <= 128:
        TR = _round_up(max(R, 1), 16)
    elif R <= 2048:
        TR = 128
    else:
        TR = 256
    Rp = _round_up(R, TR)

    f32 = jnp.float32
    # head_feat stays f32 (cast to bf16 inside the kernel); only row-pad if needed.
    head_p = head_feat.astype(f32)
    if Rp != R:
        head_p = jnp.zeros((Rp, K), f32).at[:R, :].set(head_p)
    sent_p = sent_feat.astype(f32)
    if Dp != D:
        sent_p = jnp.zeros((S, Dp), f32).at[:, :D].set(sent_p)

    grid = (Rp // TR,)

    out = pl.pallas_call(
        _ltr_kernel,
        out_shape=jax.ShapeDtypeStruct((S, Rp), f32),
        grid_spec=pltpu.PrefetchScalarGridSpec(
            num_scalar_prefetch=0,
            grid=grid,
            in_specs=[
                pl.BlockSpec((TR, K), lambda i: (i, 0)),   # head_feat tile (f32)
                pl.BlockSpec((K, Dp), lambda i: (0, 0)),   # head_fc weight (bf16, resident)
                pl.BlockSpec((1, Dp), lambda i: (0, 0)),   # head_fc bias
                pl.BlockSpec((S, Dp), lambda i: (0, 0)),   # sent_feat
                pl.BlockSpec((1, Dp), lambda i: (0, 0)),   # rank_fc weight
            ],
            out_specs=pl.BlockSpec((S, TR), lambda i: (0, i)),
        ),
        compiler_params=pltpu.CompilerParams(
            dimension_semantics=("parallel",)),
    )(head_p, w_p, b_p, sent_p, r_p)

    # Padded roi rows produce relu(0 + b) != 0 -> nonzero garbage columns; this
    # slice is what makes the result correct. Do not remove.
    return out[:, :R]


# ----------------------------------------------------------------------------
# Test
# ----------------------------------------------------------------------------
if __name__ == "__main__":
    key = jax.random.PRNGKey(0)
    k_hw, k_hb, k_rw, k_sent, k_head = jax.random.split(key, 5)

    SENT_NUM, ROI_NUM = 5, 12
    SENT_FEAT_DIM, HEAD_FEAT_DIM = 300, 2048   # 2048 fixed by nn.Linear(2048, D)

    bound_h = 1.0 / (HEAD_FEAT_DIM ** 0.5)
    bound_r = 1.0 / (SENT_FEAT_DIM ** 0.5)
    params = {
        "head_fc_w": jax.random.uniform(k_hw, (HEAD_FEAT_DIM, SENT_FEAT_DIM),
                                        jnp.float32, -bound_h, bound_h),
        "head_fc_b": jax.random.uniform(k_hb, (SENT_FEAT_DIM,),
                                        jnp.float32, -bound_h, bound_h),
        "rank_fc_w": jax.random.uniform(k_rw, (SENT_FEAT_DIM,),
                                        jnp.float32, -bound_r, bound_r),
    }
    sent_feat = jax.random.normal(k_sent, (SENT_NUM, SENT_FEAT_DIM), jnp.float32)
    head_feat = jax.random.normal(k_head, (ROI_NUM, HEAD_FEAT_DIM), jnp.float32)

    # Parameters are padded/cast once and cached; per-call path touches only
    # the activations.
    prepared = prepare_ltr_params(params)
    fwd = jax.jit(ltr_forward)

    rank_score = jax.block_until_ready(fwd(prepared, sent_feat, head_feat))

    # Pure-JAX f32 reference of LTRSubNetwork.forward (both matmuls in the
    # kernel feed the MXU in bf16 with f32 accumulation -> loose tolerance).
    mapped_ref = jnp.maximum(
        head_feat @ params["head_fc_w"] + params["head_fc_b"], 0.0)
    score_ref = (sent_feat * params["rank_fc_w"]) @ mapped_ref.T

    assert rank_score.shape == (SENT_NUM, ROI_NUM)
    assert rank_score.dtype == jnp.float32
    max_err = float(jnp.max(jnp.abs(rank_score - score_ref)))
    assert max_err < 5e-2, f"max abs err {max_err}"
    print("KERNEL_OK")
</pallas_src>

<mosaic_0001>
module attributes {stable_mosaic.version = 11 : i64} {
  func.func @_ltr_kernel(%arg0: i32, %arg1: memref<16x2048xf32, #tpu.memory_space<vmem>>, %arg2: memref<2048x384xbf16, #tpu.memory_space<vmem>>, %arg3: memref<1x384xf32, #tpu.memory_space<vmem>>, %arg4: memref<5x384xf32, #tpu.memory_space<vmem>>, %arg5: memref<1x384xf32, #tpu.memory_space<vmem>>, %arg6: memref<5x16xf32, #tpu.memory_space<vmem>>) attributes {dimension_semantics = [#tpu.dimension_semantics<parallel>], iteration_bounds = array<i64: 1>, scalar_prefetch = 0 : i64, scratch_operands = 0 : i64, tpu.core_type = #tpu.core_type<tc>, window_params = [{transform_indices = @transform_0, window_bounds = array<i64: 16, 2048>}, {pipeline_mode = #tpu.pipeline_mode<synchronous>, transform_indices = @transform_1, window_bounds = array<i64: 2048, 384>}, {pipeline_mode = #tpu.pipeline_mode<synchronous>, transform_indices = @transform_2, window_bounds = array<i64: 1, 384>}, {pipeline_mode = #tpu.pipeline_mode<synchronous>, transform_indices = @transform_3, window_bounds = array<i64: 5, 384>}, {pipeline_mode = #tpu.pipeline_mode<synchronous>, transform_indices = @transform_4, window_bounds = array<i64: 1, 384>}, {transform_indices = @transform_5, window_bounds = array<i64: 5, 16>}]} {
    %c0 = arith.constant 0 : index
    %c0_0 = arith.constant 0 : index
    %0 = vector.load %arg1[%c0, %c0_0] : memref<16x2048xf32, #tpu.memory_space<vmem>>, vector<16x2048xf32>
    %1 = arith.truncf %0 : vector<16x2048xf32> to vector<16x2048xbf16>
    %c0_1 = arith.constant 0 : index
    %c0_2 = arith.constant 0 : index
    %2 = vector.load %arg2[%c0_1, %c0_2] : memref<2048x384xbf16, #tpu.memory_space<vmem>>, vector<2048x384xbf16>
    %cst = arith.constant dense<0.000000e+00> : vector<16x384xf32>
    %3 = tpu.matmul %1, %2, %cst {dimension_numbers = #tpu.dot_dimension_numbers<[1], [0], [0], [1], [0, 0, 1, 1], [], []>} : vector<16x2048xbf16>, vector<2048x384xbf16>, vector<16x384xf32> -> vector<16x384xf32>
    %c0_3 = arith.constant 0 : index
    %c0_4 = arith.constant 0 : index
    %4 = vector.load %arg3[%c0_3, %c0_4] : memref<1x384xf32, #tpu.memory_space<vmem>>, vector<1x384xf32>
    %5 = vector.broadcast %4 : vector<1x384xf32> to vector<16x384xf32>
    %6 = arith.addf %3, %5 : vector<16x384xf32>
    %cst_5 = arith.constant 0.000000e+00 : f32
    %7 = vector.broadcast %cst_5 : f32 to vector<16x384xf32>
    %8 = arith.maximumf %6, %7 : vector<16x384xf32>
    %c0_6 = arith.constant 0 : index
    %c0_7 = arith.constant 0 : index
    %9 = vector.load %arg4[%c0_6, %c0_7] : memref<5x384xf32, #tpu.memory_space<vmem>>, vector<5x384xf32>
    %c0_8 = arith.constant 0 : index
    %c0_9 = arith.constant 0 : index
    %10 = vector.load %arg5[%c0_8, %c0_9] : memref<1x384xf32, #tpu.memory_space<vmem>>, vector<1x384xf32>
    %11 = vector.broadcast %10 : vector<1x384xf32> to vector<5x384xf32>
    %12 = arith.mulf %9, %11 : vector<5x384xf32>
    %13 = arith.truncf %12 : vector<5x384xf32> to vector<5x384xbf16>
    %14 = arith.truncf %8 : vector<16x384xf32> to vector<16x384xbf16>
    %cst_10 = arith.constant dense<0.000000e+00> : vector<5x16xf32>
    %15 = tpu.matmul %13, %14, %cst_10 {dimension_numbers = #tpu.dot_dimension_numbers<[1], [1], [0], [0], [0, 0, 1, 0], [], []>} : vector<5x384xbf16>, vector<16x384xbf16>, vector<5x16xf32> -> vector<5x16xf32>
    %c0_11 = arith.constant 0 : index
    %c0_12 = arith.constant 0 : index
    %16 = vector.load %arg6[%c0_11, %c0_12] : memref<5x16xf32, #tpu.memory_space<vmem>>, vector<5x16xf32>
    tpu.vector_store %arg6[%c0_11, %c0_12], %15 {strides = array<i32>} : memref<5x16xf32, #tpu.memory_space<vmem>>, vector<5x16xf32>,
    return
  }
  func.func @transform_0(%arg0: i32) -> (i32, i32) {
    %c0_i32 = arith.constant 0 : i32
    %c0_i32_0 = arith.constant 0 : i32
    return %arg0, %c0_i32 : i32, i32
  }
  func.func @transform_1(%arg0: i32) -> (i32, i32) {
    %c0_i32 = arith.constant 0 : i32
    %c0_i32_0 = arith.constant 0 : i32
    %c0_i32_1 = arith.constant 0 : i32
    return %c0_i32, %c0_i32_0 : i32, i32
  }
  func.func @transform_2(%arg0: i32) -> (i32, i32) {
    %c0_i32 = arith.constant 0 : i32
    %c0_i32_0 = arith.constant 0 : i32
    %c0_i32_1 = arith.constant 0 : i32
    return %c0_i32, %c0_i32_0 : i32, i32
  }
  func.func @transform_3(%arg0: i32) -> (i32, i32) {
    %c0_i32 = arith.constant 0 : i32
    %c0_i32_0 = arith.constant 0 : i32
    %c0_i32_1 = arith.constant 0 : i32
    return %c0_i32, %c0_i32_0 : i32, i32
  }
  func.func @transform_4(%arg0: i32) -> (i32, i32) {
    %c0_i32 = arith.constant 0 : i32
    %c0_i32_0 = arith.constant 0 : i32
    %c0_i32_1 = arith.constant 0 : i32
    return %c0_i32, %c0_i32_0 : i32, i32
  }
  func.func @transform_5(%arg0: i32) -> (i32, i32) {
    %c0_i32 = arith.constant 0 : i32
    %c0_i32_0 = arith.constant 0 : i32
    return %c0_i32, %arg0 : i32, i32
  }
}

</mosaic_0001>

<llo_original>
// kernel: ltr_forward.1
$region0: #{ltr_forward.1}
  #allocation0 [shape = 'u32[]', space=smem, size = 0x4, offset = 0x4, fixed_abs, tag = 'smem constant byte address 0x4 - core index']
  #allocation1 [shape = 'u32[144,128]{1,0:T(1,128)}', space=vmem, size = 0x12000, scoped, tag = 'internal scratch']
  %s0 = inlined_call_operand.vmem [shape: f32[16,2048], index: 0, kind: input, shape index: {}]
  %s1 = inlined_call_operand.hbm [shape: bf16[2048,384], index: 1, kind: input, shape index: {}]
  %s2 = inlined_call_operand.hbm [shape: f32[1,384], index: 2, kind: input, shape index: {}]
  %s3 = inlined_call_operand.vmem [shape: f32[5,384], index: 3, kind: input, shape index: {}]
  %s4 = inlined_call_operand.hbm [shape: f32[1,384], index: 4, kind: input, shape index: {}]
  %s5 = inlined_call_operand.hbm [shape: f32[5,16], index: 5, kind: output, shape index: {}]
  %s6 = sld [smem:[#allocation0]]
  $region42: #{ltr_forward.1} parent=0
    _
  %s8 = ssub.s32 1, %s6
  %s9 = scalar_select 0, %s8, %s6
  $region1: #{ltr_forward.1} parent=0
    #allocation2 [shape = 'u8[1572864]{0}', space=vmem, size = 0x180000, scoped, tag = 'input window, operand 1, single buffered']
    #allocation3 [shape = 's32[1]{0}', space=sflag, size = 0x4, scoped, tag = 'scoped memory for ltr_forward.1']
    #allocation4 [shape = 's32[1]{0}', space=sflag, size = 0x4, scoped, tag = 'scoped memory for ltr_forward.1']
    #allocation5 [shape = 'u8[1536]{0}', space=vmem, size = 0x800, scoped, tag = 'input window, operand 2, single buffered']
    #allocation6 [shape = 's32[1]{0}', space=sflag, size = 0x4, scoped, tag = 'scoped memory for ltr_forward.1']
    #allocation7 [shape = 'u8[1536]{0}', space=vmem, size = 0x800, scoped, tag = 'input window, operand 4, single buffered']
    #allocation8 [shape = 'u8[4096]{0}', space=vmem, size = 0x1000, scoped, tag = 'output window, operand 0, single buffered']
    %10 = vsyncpa [#allocation3], 0
    %11 = vsyncpa [#allocation6], 0
    %12 = vsyncpa [#allocation4], 0
    // Predicated region
    $region2: #{ltr_forward.1} parent=1 // pred_check
      _
    $region3: #{ltr_forward.1} parent=1 // pred_check_branch
      %14 = sbr.rel (0) target = $region5
    $region4: #{ltr_forward.1} parent=1 // pred_region
      _
    $region5: #{ltr_forward.1} parent=1 // pred_fallthru
      _
    // Predicated region
    $region6: #{ltr_forward.1} parent=1 // pred_check
      _
    $region7: #{ltr_forward.1} parent=1 // pred_check_branch
      %16 = sbr.rel (0) target = $region9
    $region8: #{ltr_forward.1} parent=1 // pred_region
      %s18 = ssub.s32 49152, 49152
      %19 = vsyncadd [#allocation3], %s18
      %s20 = sshll.u32 [#allocation2], 4
      %s21 = int_to_ptr.vmem [resolvable:$true] %s20
      %26 = dma.hbm_to_vmem [thread:$0]  %s1, 49152, %s21, [#allocation3], 192, 192, 12
    $region9: #{ltr_forward.1} parent=1 // pred_fallthru
      _
    // Predicated region
    $region10: #{ltr_forward.1} parent=1 // pred_check
      _
    $region11: #{ltr_forward.1} parent=1 // pred_check_branch
      %28 = sbr.rel (0) target = $region13
    $region12: #{ltr_forward.1} parent=1 // pred_region
      %s30 = ssub.s32 48, 48
      %31 = vsyncadd [#allocation6], %s30
      %s33 = sshll.u32 [#allocation5], 4
      %s34 = int_to_ptr.vmem [resolvable:$true] %s33
      %36 = dma.hbm_to_vmem [thread:$0]  %s2, 48, %s34, [#allocation6]
    $region13: #{ltr_forward.1} parent=1 // pred_fallthru
      _
    // Predicated region
    $region14: #{ltr_forward.1} parent=1 // pred_check
      _
    $region15: #{ltr_forward.1} parent=1 // pred_check_branch
      %38 = sbr.rel (0) target = $region17
    $region16: #{ltr_forward.1} parent=1 // pred_region
      _
    $region17: #{ltr_forward.1} parent=1 // pred_fallthru
      _
    // Predicated region
    $region18: #{ltr_forward.1} parent=1 // pred_check
      _
    $region19: #{ltr_forward.1} parent=1 // pred_check_branch
      %40 = sbr.rel (0) target = $region21
    $region20: #{ltr_forward.1} parent=1 // pred_region
      %s42 = ssub.s32 48, 48
      %43 = vsyncadd [#allocation6], %s42
      %s45 = sshll.u32 [#allocation7], 4
      %s46 = int_to_ptr.vmem [resolvable:$true] %s45
      %48 = dma.hbm_to_vmem [thread:$0]  %s4, 48, %s46, [#allocation6]
    $region21: #{ltr_forward.1} parent=1 // pred_fallthru
      _
    // Predicated region
    $region22: #{ltr_forward.1} parent=1 // pred_check
      _
    $region23: #{ltr_forward.1} parent=1 // pred_check_branch
      %50 = sbr.rel (0) target = $region25
    $region24: #{ltr_forward.1} parent=1 // pred_region
      %51 = dma.done [#allocation3], 49152
    $region25: #{ltr_forward.1} parent=1 // pred_fallthru
      _
    // Predicated region
    $region26: #{ltr_forward.1} parent=1 // pred_check
      _
    $region27: #{ltr_forward.1} parent=1 // pred_check_branch
      %53 = sbr.rel (0) target = $region29
    $region28: #{ltr_forward.1} parent=1 // pred_region
      %54 = dma.done [#allocation6], 48
    $region29: #{ltr_forward.1} parent=1 // pred_fallthru
      _
    // Predicated region
    $region30: #{ltr_forward.1} parent=1 // pred_check
      _
    $region31: #{ltr_forward.1} parent=1 // pred_check_branch
      %56 = sbr.rel (0) target = $region33
    $region32: #{ltr_forward.1} parent=1 // pred_region
      %57 = dma.done [#allocation6], 48
    $region33: #{ltr_forward.1} parent=1 // pred_fallthru
      _
    %v59 = vld [vmem:[%s0] sm:$0xff]
    %v60 = vld [vmem:[%s0 + $0x8] sm:$0xff]
    %v61 = vld [vmem:[%s0 + $0x10] sm:$0xff]
    %v62 = vld [vmem:[%s0 + $0x18] sm:$0xff]
    %v63 = vld [vmem:[%s0 + $0x20] sm:$0xff]
    %v64 = vld [vmem:[%s0 + $0x28] sm:$0xff]
    %v65 = vld [vmem:[%s0 + $0x30] sm:$0xff]
    %v66 = vld [vmem:[%s0 + $0x38] sm:$0xff]
    %v67 = vld [vmem:[%s0 + $0x40] sm:$0xff]
    %v68 = vld [vmem:[%s0 + $0x48] sm:$0xff]
    %v69 = vld [vmem:[%s0 + $0x50] sm:$0xff]
    %v70 = vld [vmem:[%s0 + $0x58] sm:$0xff]
    %v71 = vld [vmem:[%s0 + $0x60] sm:$0xff]
    %v72 = vld [vmem:[%s0 + $0x68] sm:$0xff]
    %v73 = vld [vmem:[%s0 + $0x70] sm:$0xff]
    %v74 = vld [vmem:[%s0 + $0x78] sm:$0xff]
    %v75 = vld [vmem:[%s0 + $0x80] sm:$0xff]
    %v76 = vld [vmem:[%s0 + $0x88] sm:$0xff]
    %v77 = vld [vmem:[%s0 + $0x90] sm:$0xff]
    %v78 = vld [vmem:[%s0 + $0x98] sm:$0xff]
    %v79 = vld [vmem:[%s0 + $0xa0] sm:$0xff]
    %v80 = vld [vmem:[%s0 + $0xa8] sm:$0xff]
    %v81 = vld [vmem:[%s0 + $0xb0] sm:$0xff]
    %v82 = vld [vmem:[%s0 + $0xb8] sm:$0xff]
    %v83 = vld [vmem:[%s0 + $0xc0] sm:$0xff]
    %v84 = vld [vmem:[%s0 + $0xc8] sm:$0xff]
    %v85 = vld [vmem:[%s0 + $0xd0] sm:$0xff]
    %v86 = vld [vmem:[%s0 + $0xd8] sm:$0xff]
    %v87 = vld [vmem:[%s0 + $0xe0] sm:$0xff]
    %v88 = vld [vmem:[%s0 + $0xe8] sm:$0xff]
    %v89 = vld [vmem:[%s0 + $0xf0] sm:$0xff]
    %v90 = vld [vmem:[%s0 + $0xf8] sm:$0xff]
    %v91 = vpack.c.bf16 %v75, %v59
    %v92 = vpack.c.bf16 %v76, %v60
    %v93 = vpack.c.bf16 %v77, %v61
    %v94 = vpack.c.bf16 %v78, %v62
    %v95 = vpack.c.bf16 %v79, %v63
    %v96 = vpack.c.bf16 %v80, %v64
    %v97 = vpack.c.bf16 %v81, %v65
    %v98 = vpack.c.bf16 %v82, %v66
    %v99 = vpack.c.bf16 %v83, %v67
    %v100 = vpack.c.bf16 %v84, %v68
    %v101 = vpack.c.bf16 %v85, %v69
    %v102 = vpack.c.bf16 %v86, %v70
    %v103 = vpack.c.bf16 %v87, %v71
    %v104 = vpack.c.bf16 %v88, %v72
    %v105 = vpack.c.bf16 %v89, %v73
    %v106 = vpack.c.bf16 %v90, %v74
    %v107 = vld [vmem:[#allocation2] sm:$0xff]
    %v108 = vld [vmem:[#allocation2 + $0x8] sm:$0xf]
    %v109 = vld [vmem:[#allocation2 + $0xc] sm:$0xff]
    %v110 = vld [vmem:[#allocation2 + $0x14] sm:$0xf]
    %v111 = vld [vmem:[#allocation2 + $0x18] sm:$0xff]
    %v112 = vld [vmem:[#allocation2 + $0x20] sm:$0xf]
    %v113 = vld [vmem:[#allocation2 + $0x24] sm:$0xff]
    %v114 = vld [vmem:[#allocation2 + $0x2c] sm:$0xf]
    %v115 = vld [vmem:[#allocation2 + $0x30] sm:$0xff]
    %v116 = vld [vmem:[#allocation2 + $0x38] sm:$0xf]
    %v117 = vld [vmem:[#allocation2 + $0x3c] sm:$0xff]
    %v118 = vld [vmem:[#allocation2 + $0x44] sm:$0xf]
    %v119 = vld [vmem:[#allocation2 + $0x48] sm:$0xff]
    %v120 = vld [vmem:[#allocation2 + $0x50] sm:$0xf]
    %v121 = vld [vmem:[#allocation2 + $0x54] sm:$0xff]
    %v122 = vld [vmem:[#allocation2 + $0x5c] sm:$0xf]
    %v123 = vld [vmem:[#allocation2 + $0x60] sm:$0xff]
    %v124 = vld [vmem:[#allocation2 + $0x68] sm:$0xf]
    %v125 = vld [vmem:[#allocation2 + $0x6c] sm:$0xff]
    %v126 = vld [vmem:[#allocation2 + $0x74] sm:$0xf]
    %v127 = vld [vmem:[#allocation2 + $0x78] sm:$0xff]
    %v128 = vld [vmem:[#allocation2 + $0x80] sm:$0xf]
    %v129 = vld [vmem:[#allocation2 + $0x84] sm:$0xff]
    %v130 = vld [vmem:[#allocation2 + $0x8c] sm:$0xf]
    %v131 = vld [vmem:[#allocation2 + $0x90] sm:$0xff]
    %v132 = vld [vmem:[#allocation2 + $0x98] sm:$0xf]
    %v133 = vld [vmem:[#allocation2 + $0x9c] sm:$0xff]
    %v134 = vld [vmem:[#allocation2 + $0xa4] sm:$0xf]
    %v135 = vld [vmem:[#allocation2 + $0xa8] sm:$0xff]
    %v136 = vld [vmem:[#allocation2 + $0xb0] sm:$0xf]
    %v137 = vld [vmem:[#allocation2 + $0xb4] sm:$0xff]
    %v138 = vld [vmem:[#allocation2 + $0xbc] sm:$0xf]
    %v139 = vld [vmem:[#allocation2 + $0xc0] sm:$0xff]
    %v140 = vld [vmem:[#allocation2 + $0xc8] sm:$0xf]
    %v141 = vld [vmem:[#allocation2 + $0xcc] sm:$0xff]
    %v142 = vld [vmem:[#allocation2 + $0xd4] sm:$0xf]
    %v143 = vld [vmem:[#allocation2 + $0xd8] sm:$0xff]
    %v144 = vld [vmem:[#allocation2 + $0xe0] sm:$0xf]
    %v145 = vld [vmem:[#allocation2 + $0xe4] sm:$0xff]
    %v146 = vld [vmem:[#allocation2 + $0xec] sm:$0xf]
    %v147 = vld [vmem:[#allocation2 + $0xf0] sm:$0xff]
    %v148 = vld [vmem:[#allocation2 + $0xf8] sm:$0xf]
    %v149 = vld [vmem:[#allocation2 + $0xfc] sm:$0xff]
    %v150 = vld [vmem:[#allocation2 + $0x104] sm:$0xf]
    %v151 = vld [vmem:[#allocation2 + $0x108] sm:$0xff]
    %v152 = vld [vmem:[#allocation2 + $0x110] sm:$0xf]
    %v153 = vld [vmem:[#allocation2 + $0x114] sm:$0xff]
    %v154 = vld [vmem:[#allocation2 + $0x11c] sm:$0xf]
    %v155 = vld [vmem:[#allocation2 + $0x120] sm:$0xff]
    %v156 = vld [vmem:[#allocation2 + $0x128] sm:$0xf]
    %v157 = vld [vmem:[#allocation2 + $0x12c] sm:$0xff]
    %v158 = vld [vmem:[#allocation2 + $0x134] sm:$0xf]
    %v159 = vld [vmem:[#allocation2 + $0x138] sm:$0xff]
    %v160 = vld [vmem:[#allocation2 + $0x140] sm:$0xf]
    %v161 = vld [vmem:[#allocation2 + $0x144] sm:$0xff]
    %v162 = vld [vmem:[#allocation2 + $0x14c] sm:$0xf]
    %v163 = vld [vmem:[#allocation2 + $0x150] sm:$0xff]
    %v164 = vld [vmem:[#allocation2 + $0x158] sm:$0xf]
    %v165 = vld [vmem:[#allocation2 + $0x15c] sm:$0xff]
    %v166 = vld [vmem:[#allocation2 + $0x164] sm:$0xf]
    %v167 = vld [vmem:[#allocation2 + $0x168] sm:$0xff]
    %v168 = vld [vmem:[#allocation2 + $0x170] sm:$0xf]
    %v169 = vld [vmem:[#allocation2 + $0x174] sm:$0xff]
    %v170 = vld [vmem:[#allocation2 + $0x17c] sm:$0xf]
    %v171 = vld [vmem:[#allocation2 + $0x180] sm:$0xff]
    %v172 = vld [vmem:[#allocation2 + $0x188] sm:$0xf]
    %v173 = vld [vmem:[#allocation2 + $0x18c] sm:$0xff]
    %v174 = vld [vmem:[#allocation2 + $0x194] sm:$0xf]
    %v175 = vld [vmem:[#allocation2 + $0x198] sm:$0xff]
    %v176 = vld [vmem:[#allocation2 + $0x1a0] sm:$0xf]
    %v177 = vld [vmem:[#allocation2 + $0x1a4] sm:$0xff]
    %v178 = vld [vmem:[#allocation2 + $0x1ac] sm:$0xf]
    %v179 = vld [vmem:[#allocation2 + $0x1b0] sm:$0xff]
    %v180 = vld [vmem:[#allocation2 + $0x1b8] sm:$0xf]
    %v181 = vld [vmem:[#allocation2 + $0x1bc] sm:$0xff]
    %v182 = vld [vmem:[#allocation2 + $0x1c4] sm:$0xf]
    %v183 = vld [vmem:[#allocation2 + $0x1c8] sm:$0xff]
    %v184 = vld [vmem:[#allocation2 + $0x1d0] sm:$0xf]
    %v185 = vld [vmem:[#allocation2 + $0x1d4] sm:$0xff]
    %v186 = vld [vmem:[#allocation2 + $0x1dc] sm:$0xf]
    %v187 = vld [vmem:[#allocation2 + $0x1e0] sm:$0xff]
    %v188 = vld [vmem:[#allocation2 + $0x1e8] sm:$0xf]
    %v189 = vld [vmem:[#allocation2 + $0x1ec] sm:$0xff]
    %v190 = vld [vmem:[#allocation2 + $0x1f4] sm:$0xf]
    %v191 = vld [vmem:[#allocation2 + $0x1f8] sm:$0xff]
    %v192 = vld [vmem:[#allocation2 + $0x200] sm:$0xf]
    %v193 = vld [vmem:[#allocation2 + $0x204] sm:$0xff]
    %v194 = vld [vmem:[#allocation2 + $0x20c] sm:$0xf]
    %v195 = vld [vmem:[#allocation2 + $0x210] sm:$0xff]
    %v196 = vld [vmem:[#allocation2 + $0x218] sm:$0xf]
    %v197 = vld [vmem:[#allocation2 + $0x21c] sm:$0xff]
    %v198 = vld [vmem:[#allocation2 + $0x224] sm:$0xf]
    %v199 = vld [vmem:[#allocation2 + $0x228] sm:$0xff]
    %v200 = vld [vmem:[#allocation2 + $0x230] sm:$0xf]
    %v201 = vld [vmem:[#allocation2 + $0x234] sm:$0xff]
    %v202 = vld [vmem:[#allocation2 + $0x23c] sm:$0xf]
    %v203 = vld [vmem:[#allocation2 + $0x240] sm:$0xff]
    %v204 = vld [vmem:[#allocation2 + $0x248] sm:$0xf]
    %v205 = vld [vmem:[#allocation2 + $0x24c] sm:$0xff]
    %v206 = vld [vmem:[#allocation2 + $0x254] sm:$0xf]
    %v207 = vld [vmem:[#allocation2 + $0x258] sm:$0xff]
    %v208 = vld [vmem:[#allocation2 + $0x260] sm:$0xf]
    %v209 = vld [vmem:[#allocation2 + $0x264] sm:$0xff]
    %v210 = vld [vmem:[#allocation2 + $0x26c] sm:$0xf]
    %v211 = vld [vmem:[#allocation2 + $0x270] sm:$0xff]
    %v212 = vld [vmem:[#allocation2 + $0x278] sm:$0xf]
    %v213 = vld [vmem:[#allocation2 + $0x27c] sm:$0xff]
    %v214 = vld [vmem:[#allocation2 + $0x284] sm:$0xf]
    %v215 = vld [vmem:[#allocation2 + $0x288] sm:$0xff]
    %v216 = vld [vmem:[#allocation2 + $0x290] sm:$0xf]
    %v217 = vld [vmem:[#allocation2 + $0x294] sm:$0xff]
    %v218 = vld [vmem:[#allocation2 + $0x29c] sm:$0xf]
    %v219 = vld [vmem:[#allocation2 + $0x2a0] sm:$0xff]
    %v220 = vld [vmem:[#allocation2 + $0x2a8] sm:$0xf]
    %v221 = vld [vmem:[#allocation2 + $0x2ac] sm:$0xff]
    %v222 = vld [vmem:[#allocation2 + $0x2b4] sm:$0xf]
    %v223 = vld [vmem:[#allocation2 + $0x2b8] sm:$0xff]
    %v224 = vld [vmem:[#allocation2 + $0x2c0] sm:$0xf]
    %v225 = vld [vmem:[#allocation2 + $0x2c4] sm:$0xff]
    %v226 = vld [vmem:[#allocation2 + $0x2cc] sm:$0xf]
    %v227 = vld [vmem:[#allocation2 + $0x2d0] sm:$0xff]
    %v228 = vld [vmem:[#allocation2 + $0x2d8] sm:$0xf]
    %v229 = vld [vmem:[#allocation2 + $0x2dc] sm:$0xff]
    %v230 = vld [vmem:[#allocation2 + $0x2e4] sm:$0xf]
    %v231 = vld [vmem:[#allocation2 + $0x2e8] sm:$0xff]
    %v232 = vld [vmem:[#allocation2 + $0x2f0] sm:$0xf]
    %v233 = vld [vmem:[#allocation2 + $0x2f4] sm:$0xff]
    %v234 = vld [vmem:[#allocation2 + $0x2fc] sm:$0xf]
    %v235 = vld [vmem:[#allocation2 + $0x300] sm:$0xff]
    %v236 = vld [vmem:[#allocation2 + $0x308] sm:$0xf]
    %v237 = vld [vmem:[#allocation2 + $0x30c] sm:$0xff]
    %v238 = vld [vmem:[#allocation2 + $0x314] sm:$0xf]
    %v239 = vld [vmem:[#allocation2 + $0x318] sm:$0xff]
    %v240 = vld [vmem:[#allocation2 + $0x320] sm:$0xf]
    %v241 = vld [vmem:[#allocation2 + $0x324] sm:$0xff]
    %v242 = vld [vmem:[#allocation2 + $0x32c] sm:$0xf]
    %v243 = vld [vmem:[#allocation2 + $0x330] sm:$0xff]
    %v244 = vld [vmem:[#allocation2 + $0x338] sm:$0xf]
    %v245 = vld [vmem:[#allocation2 + $0x33c] sm:$0xff]
    %v246 = vld [vmem:[#allocation2 + $0x344] sm:$0xf]
    %v247 = vld [vmem:[#allocation2 + $0x348] sm:$0xff]
    %v248 = vld [vmem:[#allocation2 + $0x350] sm:$0xf]
    %v249 = vld [vmem:[#allocation2 + $0x354] sm:$0xff]
    %v250 = vld [vmem:[#allocation2 + $0x35c] sm:$0xf]
    %v251 = vld [vmem:[#allocation2 + $0x360] sm:$0xff]
    %v252 = vld [vmem:[#allocation2 + $0x368] sm:$0xf]
    %v253 = vld [vmem:[#allocation2 + $0x36c] sm:$0xff]
    %v254 = vld [vmem:[#allocation2 + $0x374] sm:$0xf]
    %v255 = vld [vmem:[#allocation2 + $0x378] sm:$0xff]
    %v256 = vld [vmem:[#allocation2 + $0x380] sm:$0xf]
    %v257 = vld [vmem:[#allocation2 + $0x384] sm:$0xff]
    %v258 = vld [vmem:[#allocation2 + $0x38c] sm:$0xf]
    %v259 = vld [vmem:[#allocation2 + $0x390] sm:$0xff]
    %v260 = vld [vmem:[#allocation2 + $0x398] sm:$0xf]
    %v261 = vld [vmem:[#allocation2 + $0x39c] sm:$0xff]
    %v262 = vld [vmem:[#allocation2 + $0x3a4] sm:$0xf]
    %v263 = vld [vmem:[#allocation2 + $0x3a8] sm:$0xff]
    %v264 = vld [vmem:[#allocation2 + $0x3b0] sm:$0xf]
    %v265 = vld [vmem:[#allocation2 + $0x3b4] sm:$0xff]
    %v266 = vld [vmem:[#allocation2 + $0x3bc] sm:$0xf]
    %v267 = vld [vmem:[#allocation2 + $0x3c0] sm:$0xff]
    %v268 = vld [vmem:[#allocation2 + $0x3c8] sm:$0xf]
    %v269 = vld [vmem:[#allocation2 + $0x3cc] sm:$0xff]
    %v270 = vld [vmem:[#allocation2 + $0x3d4] sm:$0xf]
    %v271 = vld [vmem:[#allocation2 + $0x3d8] sm:$0xff]
    %v272 = vld [vmem:[#allocation2 + $0x3e0] sm:$0xf]
    %v273 = vld [vmem:[#allocation2 + $0x3e4] sm:$0xff]
    %v274 = vld [vmem:[#allocation2 + $0x3ec] sm:$0xf]
    %v275 = vld [vmem:[#allocation2 + $0x3f0] sm:$0xff]
    %v276 = vld [vmem:[#allocation2 + $0x3f8] sm:$0xf]
    %v277 = vld [vmem:[#allocation2 + $0x3fc] sm:$0xff]
    %v278 = vld [vmem:[#allocation2 + $0x404] sm:$0xf]
    %v279 = vld [vmem:[#allocation2 + $0x408] sm:$0xff]
    %v280 = vld [vmem:[#allocation2 + $0x410] sm:$0xf]
    %v281 = vld [vmem:[#allocation2 + $0x414] sm:$0xff]
    %v282 = vld [vmem:[#allocation2 + $0x41c] sm:$0xf]
    %v283 = vld [vmem:[#allocation2 + $0x420] sm:$0xff]
    %v284 = vld [vmem:[#allocation2 + $0x428] sm:$0xf]
    %v285 = vld [vmem:[#allocation2 + $0x42c] sm:$0xff]
    %v286 = vld [vmem:[#allocation2 + $0x434] sm:$0xf]
    %v287 = vld [vmem:[#allocation2 + $0x438] sm:$0xff]
    %v288 = vld [vmem:[#allocation2 + $0x440] sm:$0xf]
    %v289 = vld [vmem:[#allocation2 + $0x444] sm:$0xff]
    %v290 = vld [vmem:[#allocation2 + $0x44c] sm:$0xf]
    %v291 = vld [vmem:[#allocation2 + $0x450] sm:$0xff]
    %v292 = vld [vmem:[#allocation2 + $0x458] sm:$0xf]
    %v293 = vld [vmem:[#allocation2 + $0x45c] sm:$0xff]
    %v294 = vld [vmem:[#allocation2 + $0x464] sm:$0xf]
    %v295 = vld [vmem:[#allocation2 + $0x468] sm:$0xff]
    %v296 = vld [vmem:[#allocation2 + $0x470] sm:$0xf]
    %v297 = vld [vmem:[#allocation2 + $0x474] sm:$0xff]
    %v298 = vld [vmem:[#allocation2 + $0x47c] sm:$0xf]
    %v299 = vld [vmem:[#allocation2 + $0x480] sm:$0xff]
    %v300 = vld [vmem:[#allocation2 + $0x488] sm:$0xf]
    %v301 = vld [vmem:[#allocation2 + $0x48c] sm:$0xff]
    %v302 = vld [vmem:[#allocation2 + $0x494] sm:$0xf]
    %v303 = vld [vmem:[#allocation2 + $0x498] sm:$0xff]
    %v304 = vld [vmem:[#allocation2 + $0x4a0] sm:$0xf]
    %v305 = vld [vmem:[#allocation2 + $0x4a4] sm:$0xff]
    %v306 = vld [vmem:[#allocation2 + $0x4ac] sm:$0xf]
    %v307 = vld [vmem:[#allocation2 + $0x4b0] sm:$0xff]
    %v308 = vld [vmem:[#allocation2 + $0x4b8] sm:$0xf]
    %v309 = vld [vmem:[#allocation2 + $0x4bc] sm:$0xff]
    %v310 = vld [vmem:[#allocation2 + $0x4c4] sm:$0xf]
    %v311 = vld [vmem:[#allocation2 + $0x4c8] sm:$0xff]
    %v312 = vld [vmem:[#allocation2 + $0x4d0] sm:$0xf]
    %v313 = vld [vmem:[#allocation2 + $0x4d4] sm:$0xff]
    %v314 = vld [vmem:[#allocation2 + $0x4dc] sm:$0xf]
    %v315 = vld [vmem:[#allocation2 + $0x4e0] sm:$0xff]
    %v316 = vld [vmem:[#allocation2 + $0x4e8] sm:$0xf]
    %v317 = vld [vmem:[#allocation2 + $0x4ec] sm:$0xff]
    %v318 = vld [vmem:[#allocation2 + $0x4f4] sm:$0xf]
    %v319 = vld [vmem:[#allocation2 + $0x4f8] sm:$0xff]
    %v320 = vld [vmem:[#allocation2 + $0x500] sm:$0xf]
    %v321 = vld [vmem:[#allocation2 + $0x504] sm:$0xff]
    %v322 = vld [vmem:[#allocation2 + $0x50c] sm:$0xf]
    %v323 = vld [vmem:[#allocation2 + $0x510] sm:$0xff]
    %v324 = vld [vmem:[#allocation2 + $0x518] sm:$0xf]
    %v325 = vld [vmem:[#allocation2 + $0x51c] sm:$0xff]
    %v326 = vld [vmem:[#allocation2 + $0x524] sm:$0xf]
    %v327 = vld [vmem:[#allocation2 + $0x528] sm:$0xff]
    %v328 = vld [vmem:[#allocation2 + $0x530] sm:$0xf]
    %v329 = vld [vmem:[#allocation2 + $0x534] sm:$0xff]
    %v330 = vld [vmem:[#allocation2 + $0x53c] sm:$0xf]
    %v331 = vld [vmem:[#allocation2 + $0x540] sm:$0xff]
    %v332 = vld [vmem:[#allocation2 + $0x548] sm:$0xf]
    %v333 = vld [vmem:[#allocation2 + $0x54c] sm:$0xff]
    %v334 = vld [vmem:[#allocation2 + $0x554] sm:$0xf]
    %v335 = vld [vmem:[#allocation2 + $0x558] sm:$0xff]
    %v336 = vld [vmem:[#allocation2 + $0x560] sm:$0xf]
    %v337 = vld [vmem:[#allocation2 + $0x564] sm:$0xff]
    %v338 = vld [vmem:[#allocation2 + $0x56c] sm:$0xf]
    %v339 = vld [vmem:[#allocation2 + $0x570] sm:$0xff]
    %v340 = vld [vmem:[#allocation2 + $0x578] sm:$0xf]
    %v341 = vld [vmem:[#allocation2 + $0x57c] sm:$0xff]
    %v342 = vld [vmem:[#allocation2 + $0x584] sm:$0xf]
    %v343 = vld [vmem:[#allocation2 + $0x588] sm:$0xff]
    %v344 = vld [vmem:[#allocation2 + $0x590] sm:$0xf]
    %v345 = vld [vmem:[#allocation2 + $0x594] sm:$0xff]
    %v346 = vld [vmem:[#allocation2 + $0x59c] sm:$0xf]
    %v347 = vld [vmem:[#allocation2 + $0x5a0] sm:$0xff]
    %v348 = vld [vmem:[#allocation2 + $0x5a8] sm:$0xf]
    %v349 = vld [vmem:[#allocation2 + $0x5ac] sm:$0xff]
    %v350 = vld [vmem:[#allocation2 + $0x5b4] sm:$0xf]
    %v351 = vld [vmem:[#allocation2 + $0x5b8] sm:$0xff]
    %v352 = vld [vmem:[#allocation2 + $0x5c0] sm:$0xf]
    %v353 = vld [vmem:[#allocation2 + $0x5c4] sm:$0xff]
    %v354 = vld [vmem:[#allocation2 + $0x5cc] sm:$0xf]
    %v355 = vld [vmem:[#allocation2 + $0x5d0] sm:$0xff]
    %v356 = vld [vmem:[#allocation2 + $0x5d8] sm:$0xf]
    %v357 = vld [vmem:[#allocation2 + $0x5dc] sm:$0xff]
    %v358 = vld [vmem:[#allocation2 + $0x5e4] sm:$0xf]
    %v359 = vld [vmem:[#allocation2 + $0x5e8] sm:$0xff]
    %v360 = vld [vmem:[#allocation2 + $0x5f0] sm:$0xf]
    %v361 = vld [vmem:[#allocation2 + $0x5f4] sm:$0xff]
    %v362 = vld [vmem:[#allocation2 + $0x5fc] sm:$0xf]
    %v363 = vld [vmem:[#allocation2 + $0x600] sm:$0xff]
    %v364 = vld [vmem:[#allocation2 + $0x608] sm:$0xf]
    %v365 = vld [vmem:[#allocation2 + $0x60c] sm:$0xff]
    %v366 = vld [vmem:[#allocation2 + $0x614] sm:$0xf]
    %v367 = vld [vmem:[#allocation2 + $0x618] sm:$0xff]
    %v368 = vld [vmem:[#allocation2 + $0x620] sm:$0xf]
    %v369 = vld [vmem:[#allocation2 + $0x624] sm:$0xff]
    %v370 = vld [vmem:[#allocation2 + $0x62c] sm:$0xf]
    %v371 = vld [vmem:[#allocation2 + $0x630] sm:$0xff]
    %v372 = vld [vmem:[#allocation2 + $0x638] sm:$0xf]
    %v373 = vld [vmem:[#allocation2 + $0x63c] sm:$0xff]
    %v374 = vld [vmem:[#allocation2 + $0x644] sm:$0xf]
    %v375 = vld [vmem:[#allocation2 + $0x648] sm:$0xff]
    %v376 = vld [vmem:[#allocation2 + $0x650] sm:$0xf]
    %v377 = vld [vmem:[#allocation2 + $0x654] sm:$0xff]
    %v378 = vld [vmem:[#allocation2 + $0x65c] sm:$0xf]
    %v379 = vld [vmem:[#allocation2 + $0x660] sm:$0xff]
    %v380 = vld [vmem:[#allocation2 + $0x668] sm:$0xf]
    %v381 = vld [vmem:[#allocation2 + $0x66c] sm:$0xff]
    %v382 = vld [vmem:[#allocation2 + $0x674] sm:$0xf]
    %v383 = vld [vmem:[#allocation2 + $0x678] sm:$0xff]
    %v384 = vld [vmem:[#allocation2 + $0x680] sm:$0xf]
    %v385 = vld [vmem:[#allocation2 + $0x684] sm:$0xff]
    %v386 = vld [vmem:[#allocation2 + $0x68c] sm:$0xf]
    %v387 = vld [vmem:[#allocation2 + $0x690] sm:$0xff]
    %v388 = vld [vmem:[#allocation2 + $0x698] sm:$0xf]
    %v389 = vld [vmem:[#allocation2 + $0x69c] sm:$0xff]
    %v390 = vld [vmem:[#allocation2 + $0x6a4] sm:$0xf]
    %v391 = vld [vmem:[#allocation2 + $0x6a8] sm:$0xff]
    %v392 = vld [vmem:[#allocation2 + $0x6b0] sm:$0xf]
    %v393 = vld [vmem:[#allocation2 + $0x6b4] sm:$0xff]
    %v394 = vld [vmem:[#allocation2 + $0x6bc] sm:$0xf]
    %v395 = vld [vmem:[#allocation2 + $0x6c0] sm:$0xff]
    %v396 = vld [vmem:[#allocation2 + $0x6c8] sm:$0xf]
    %v397 = vld [vmem:[#allocation2 + $0x6cc] sm:$0xff]
    %v398 = vld [vmem:[#allocation2 + $0x6d4] sm:$0xf]
    %v399 = vld [vmem:[#allocation2 + $0x6d8] sm:$0xff]
    %v400 = vld [vmem:[#allocation2 + $0x6e0] sm:$0xf]
    %v401 = vld [vmem:[#allocation2 + $0x6e4] sm:$0xff]
    %v402 = vld [vmem:[#allocation2 + $0x6ec] sm:$0xf]
    %v403 = vld [vmem:[#allocation2 + $0x6f0] sm:$0xff]
    %v404 = vld [vmem:[#allocation2 + $0x6f8] sm:$0xf]
    %v405 = vld [vmem:[#allocation2 + $0x6fc] sm:$0xff]
    %v406 = vld [vmem:[#allocation2 + $0x704] sm:$0xf]
    %v407 = vld [vmem:[#allocation2 + $0x708] sm:$0xff]
    %v408 = vld [vmem:[#allocation2 + $0x710] sm:$0xf]
    %v409 = vld [vmem:[#allocation2 + $0x714] sm:$0xff]
    %v410 = vld [vmem:[#allocation2 + $0x71c] sm:$0xf]
    %v411 = vld [vmem:[#allocation2 + $0x720] sm:$0xff]
    %v412 = vld [vmem:[#allocation2 + $0x728] sm:$0xf]
    %v413 = vld [vmem:[#allocation2 + $0x72c] sm:$0xff]
    %v414 = vld [vmem:[#allocation2 + $0x734] sm:$0xf]
    %v415 = vld [vmem:[#allocation2 + $0x738] sm:$0xff]
    %v416 = vld [vmem:[#allocation2 + $0x740] sm:$0xf]
    %v417 = vld [vmem:[#allocation2 + $0x744] sm:$0xff]
    %v418 = vld [vmem:[#allocation2 + $0x74c] sm:$0xf]
    %v419 = vld [vmem:[#allocation2 + $0x750] sm:$0xff]
    %v420 = vld [vmem:[#allocation2 + $0x758] sm:$0xf]
    %v421 = vld [vmem:[#allocation2 + $0x75c] sm:$0xff]
    %v422 = vld [vmem:[#allocation2 + $0x764] sm:$0xf]
    %v423 = vld [vmem:[#allocation2 + $0x768] sm:$0xff]
    %v424 = vld [vmem:[#allocation2 + $0x770] sm:$0xf]
    %v425 = vld [vmem:[#allocation2 + $0x774] sm:$0xff]
    %v426 = vld [vmem:[#allocation2 + $0x77c] sm:$0xf]
    %v427 = vld [vmem:[#allocation2 + $0x780] sm:$0xff]
    %v428 = vld [vmem:[#allocation2 + $0x788] sm:$0xf]
    %v429 = vld [vmem:[#allocation2 + $0x78c] sm:$0xff]
    %v430 = vld [vmem:[#allocation2 + $0x794] sm:$0xf]
    %v431 = vld [vmem:[#allocation2 + $0x798] sm:$0xff]
    %v432 = vld [vmem:[#allocation2 + $0x7a0] sm:$0xf]
    %v433 = vld [vmem:[#allocation2 + $0x7a4] sm:$0xff]
    %v434 = vld [vmem:[#allocation2 + $0x7ac] sm:$0xf]
    %v435 = vld [vmem:[#allocation2 + $0x7b0] sm:$0xff]
    %v436 = vld [vmem:[#allocation2 + $0x7b8] sm:$0xf]
    %v437 = vld [vmem:[#allocation2 + $0x7bc] sm:$0xff]
    %v438 = vld [vmem:[#allocation2 + $0x7c4] sm:$0xf]
    %v439 = vld [vmem:[#allocation2 + $0x7c8] sm:$0xff]
    %v440 = vld [vmem:[#allocation2 + $0x7d0] sm:$0xf]
    %v441 = vld [vmem:[#allocation2 + $0x7d4] sm:$0xff]
    %v442 = vld [vmem:[#allocation2 + $0x7dc] sm:$0xf]
    %v443 = vld [vmem:[#allocation2 + $0x7e0] sm:$0xff]
    %v444 = vld [vmem:[#allocation2 + $0x7e8] sm:$0xf]
    %v445 = vld [vmem:[#allocation2 + $0x7ec] sm:$0xff]
    %v446 = vld [vmem:[#allocation2 + $0x7f4] sm:$0xf]
    %v447 = vld [vmem:[#allocation2 + $0x7f8] sm:$0xff]
    %v448 = vld [vmem:[#allocation2 + $0x800] sm:$0xf]
    %v449 = vld [vmem:[#allocation2 + $0x804] sm:$0xff]
    %v450 = vld [vmem:[#allocation2 + $0x80c] sm:$0xf]
    %v451 = vld [vmem:[#allocation2 + $0x810] sm:$0xff]
    %v452 = vld [vmem:[#allocation2 + $0x818] sm:$0xf]
    %v453 = vld [vmem:[#allocation2 + $0x81c] sm:$0xff]
    %v454 = vld [vmem:[#allocation2 + $0x824] sm:$0xf]
    %v455 = vld [vmem:[#allocation2 + $0x828] sm:$0xff]
    %v456 = vld [vmem:[#allocation2 + $0x830] sm:$0xf]
    %v457 = vld [vmem:[#allocation2 + $0x834] sm:$0xff]
    %v458 = vld [vmem:[#allocation2 + $0x83c] sm:$0xf]
    %v459 = vld [vmem:[#allocation2 + $0x840] sm:$0xff]
    %v460 = vld [vmem:[#allocation2 + $0x848] sm:$0xf]
    %v461 = vld [vmem:[#allocation2 + $0x84c] sm:$0xff]
    %v462 = vld [vmem:[#allocation2 + $0x854] sm:$0xf]
    %v463 = vld [vmem:[#allocation2 + $0x858] sm:$0xff]
    %v464 = vld [vmem:[#allocation2 + $0x860] sm:$0xf]
    %v465 = vld [vmem:[#allocation2 + $0x864] sm:$0xff]
    %v466 = vld [vmem:[#allocation2 + $0x86c] sm:$0xf]
    %v467 = vld [vmem:[#allocation2 + $0x870] sm:$0xff]
    %v468 = vld [vmem:[#allocation2 + $0x878] sm:$0xf]
    %v469 = vld [vmem:[#allocation2 + $0x87c] sm:$0xff]
    %v470 = vld [vmem:[#allocation2 + $0x884] sm:$0xf]
    %v471 = vld [vmem:[#allocation2 + $0x888] sm:$0xff]
    %v472 = vld [vmem:[#allocation2 + $0x890] sm:$0xf]
    %v473 = vld [vmem:[#allocation2 + $0x894] sm:$0xff]
    %v474 = vld [vmem:[#allocation2 + $0x89c] sm:$0xf]
    %v475 = vld [vmem:[#allocation2 + $0x8a0] sm:$0xff]
    %v476 = vld [vmem:[#allocation2 + $0x8a8] sm:$0xf]
    %v477 = vld [vmem:[#allocation2 + $0x8ac] sm:$0xff]
    %v478 = vld [vmem:[#allocation2 + $0x8b4] sm:$0xf]
    %v479 = vld [vmem:[#allocation2 + $0x8b8] sm:$0xff]
    %v480 = vld [vmem:[#allocation2 + $0x8c0] sm:$0xf]
    %v481 = vld [vmem:[#allocation2 + $0x8c4] sm:$0xff]
    %v482 = vld [vmem:[#allocation2 + $0x8cc] sm:$0xf]
    %v483 = vld [vmem:[#allocation2 + $0x8d0] sm:$0xff]
    %v484 = vld [vmem:[#allocation2 + $0x8d8] sm:$0xf]
    %v485 = vld [vmem:[#allocation2 + $0x8dc] sm:$0xff]
    %v486 = vld [vmem:[#allocation2 + $0x8e4] sm:$0xf]
    %v487 = vld [vmem:[#allocation2 + $0x8e8] sm:$0xff]
    %v488 = vld [vmem:[#allocation2 + $0x8f0] sm:$0xf]
    %v489 = vld [vmem:[#allocation2 + $0x8f4] sm:$0xff]
    %v490 = vld [vmem:[#allocation2 + $0x8fc] sm:$0xf]
    %v491 = vld [vmem:[#allocation2 + $0x900] sm:$0xff]
    %v492 = vld [vmem:[#allocation2 + $0x908] sm:$0xf]
    %v493 = vld [vmem:[#allocation2 + $0x90c] sm:$0xff]
    %v494 = vld [vmem:[#allocation2 + $0x914] sm:$0xf]
    %v495 = vld [vmem:[#allocation2 + $0x918] sm:$0xff]
    %v496 = vld [vmem:[#allocation2 + $0x920] sm:$0xf]
    %v497 = vld [vmem:[#allocation2 + $0x924] sm:$0xff]
    %v498 = vld [vmem:[#allocation2 + $0x92c] sm:$0xf]
    %v499 = vld [vmem:[#allocation2 + $0x930] sm:$0xff]
    %v500 = vld [vmem:[#allocation2 + $0x938] sm:$0xf]
    %v501 = vld [vmem:[#allocation2 + $0x93c] sm:$0xff]
    %v502 = vld [vmem:[#allocation2 + $0x944] sm:$0xf]
    %v503 = vld [vmem:[#allocation2 + $0x948] sm:$0xff]
    %v504 = vld [vmem:[#allocation2 + $0x950] sm:$0xf]
    %v505 = vld [vmem:[#allocation2 + $0x954] sm:$0xff]
    %v506 = vld [vmem:[#allocation2 + $0x95c] sm:$0xf]
    %v507 = vld [vmem:[#allocation2 + $0x960] sm:$0xff]
    %v508 = vld [vmem:[#allocation2 + $0x968] sm:$0xf]
    %v509 = vld [vmem:[#allocation2 + $0x96c] sm:$0xff]
    %v510 = vld [vmem:[#allocation2 + $0x974] sm:$0xf]
    %v511 = vld [vmem:[#allocation2 + $0x978] sm:$0xff]
    %v512 = vld [vmem:[#allocation2 + $0x980] sm:$0xf]
    %v513 = vld [vmem:[#allocation2 + $0x984] sm:$0xff]
    %v514 = vld [vmem:[#allocation2 + $0x98c] sm:$0xf]
    %v515 = vld [vmem:[#allocation2 + $0x990] sm:$0xff]
    %v516 = vld [vmem:[#allocation2 + $0x998] sm:$0xf]
    %v517 = vld [vmem:[#allocation2 + $0x99c] sm:$0xff]
    %v518 = vld [vmem:[#allocation2 + $0x9a4] sm:$0xf]
    %v519 = vld [vmem:[#allocation2 + $0x9a8] sm:$0xff]
    %v520 = vld [vmem:[#allocation2 + $0x9b0] sm:$0xf]
    %v521 = vld [vmem:[#allocation2 + $0x9b4] sm:$0xff]
    %v522 = vld [vmem:[#allocation2 + $0x9bc] sm:$0xf]
    %v523 = vld [vmem:[#allocation2 + $0x9c0] sm:$0xff]
    %v524 = vld [vmem:[#allocation2 + $0x9c8] sm:$0xf]
    %v525 = vld [vmem:[#allocation2 + $0x9cc] sm:$0xff]
    %v526 = vld [vmem:[#allocation2 + $0x9d4] sm:$0xf]
    %v527 = vld [vmem:[#allocation2 + $0x9d8] sm:$0xff]
    %v528 = vld [vmem:[#allocation2 + $0x9e0] sm:$0xf]
    %v529 = vld [vmem:[#allocation2 + $0x9e4] sm:$0xff]
    %v530 = vld [vmem:[#allocation2 + $0x9ec] sm:$0xf]
    %v531 = vld [vmem:[#allocation2 + $0x9f0] sm:$0xff]
    %v532 = vld [vmem:[#allocation2 + $0x9f8] sm:$0xf]
    %v533 = vld [vmem:[#allocation2 + $0x9fc] sm:$0xff]
    %v534 = vld [vmem:[#allocation2 + $0xa04] sm:$0xf]
    %v535 = vld [vmem:[#allocation2 + $0xa08] sm:$0xff]
    %v536 = vld [vmem:[#allocation2 + $0xa10] sm:$0xf]
    %v537 = vld [vmem:[#allocation2 + $0xa14] sm:$0xff]
    %v538 = vld [vmem:[#allocation2 + $0xa1c] sm:$0xf]
    %v539 = vld [vmem:[#allocation2 + $0xa20] sm:$0xff]
    %v540 = vld [vmem:[#allocation2 + $0xa28] sm:$0xf]
    %v541 = vld [vmem:[#allocation2 + $0xa2c] sm:$0xff]
    %v542 = vld [vmem:[#allocation2 + $0xa34] sm:$0xf]
    %v543 = vld [vmem:[#allocation2 + $0xa38] sm:$0xff]
    %v544 = vld [vmem:[#allocation2 + $0xa40] sm:$0xf]
    %v545 = vld [vmem:[#allocation2 + $0xa44] sm:$0xff]
    %v546 = vld [vmem:[#allocation2 + $0xa4c] sm:$0xf]
    %v547 = vld [vmem:[#allocation2 + $0xa50] sm:$0xff]
    %v548 = vld [vmem:[#allocation2 + $0xa58] sm:$0xf]
    %v549 = vld [vmem:[#allocation2 + $0xa5c] sm:$0xff]
    %v550 = vld [vmem:[#allocation2 + $0xa64] sm:$0xf]
    %v551 = vld [vmem:[#allocation2 + $0xa68] sm:$0xff]
    %v552 = vld [vmem:[#allocation2 + $0xa70] sm:$0xf]
    %v553 = vld [vmem:[#allocation2 + $0xa74] sm:$0xff]
    %v554 = vld [vmem:[#allocation2 + $0xa7c] sm:$0xf]
    %v555 = vld [vmem:[#allocation2 + $0xa80] sm:$0xff]
    %v556 = vld [vmem:[#allocation2 + $0xa88] sm:$0xf]
    %v557 = vld [vmem:[#allocation2 + $0xa8c] sm:$0xff]
    %v558 = vld [vmem:[#allocation2 + $0xa94] sm:$0xf]
    %v559 = vld [vmem:[#allocation2 + $0xa98] sm:$0xff]
    %v560 = vld [vmem:[#allocation2 + $0xaa0] sm:$0xf]
    %v561 = vld [vmem:[#allocation2 + $0xaa4] sm:$0xff]
    %v562 = vld [vmem:[#allocation2 + $0xaac] sm:$0xf]
    %v563 = vld [vmem:[#allocation2 + $0xab0] sm:$0xff]
    %v564 = vld [vmem:[#allocation2 + $0xab8] sm:$0xf]
    %v565 = vld [vmem:[#allocation2 + $0xabc] sm:$0xff]
    %v566 = vld [vmem:[#allocation2 + $0xac4] sm:$0xf]
    %v567 = vld [vmem:[#allocation2 + $0xac8] sm:$0xff]
    %v568 = vld [vmem:[#allocation2 + $0xad0] sm:$0xf]
    %v569 = vld [vmem:[#allocation2 + $0xad4] sm:$0xff]
    %v570 = vld [vmem:[#allocation2 + $0xadc] sm:$0xf]
    %v571 = vld [vmem:[#allocation2 + $0xae0] sm:$0xff]
    %v572 = vld [vmem:[#allocation2 + $0xae8] sm:$0xf]
    %v573 = vld [vmem:[#allocation2 + $0xaec] sm:$0xff]
    %v574 = vld [vmem:[#allocation2 + $0xaf4] sm:$0xf]
    %v575 = vld [vmem:[#allocation2 + $0xaf8] sm:$0xff]
    %v576 = vld [vmem:[#allocation2 + $0xb00] sm:$0xf]
    %v577 = vld [vmem:[#allocation2 + $0xb04] sm:$0xff]
    %v578 = vld [vmem:[#allocation2 + $0xb0c] sm:$0xf]
    %v579 = vld [vmem:[#allocation2 + $0xb10] sm:$0xff]
    %v580 = vld [vmem:[#allocation2 + $0xb18] sm:$0xf]
    %v581 = vld [vmem:[#allocation2 + $0xb1c] sm:$0xff]
    %v582 = vld [vmem:[#allocation2 + $0xb24] sm:$0xf]
    %v583 = vld [vmem:[#allocation2 + $0xb28] sm:$0xff]
    %v584 = vld [vmem:[#allocation2 + $0xb30] sm:$0xf]
    %v585 = vld [vmem:[#allocation2 + $0xb34] sm:$0xff]
    %v586 = vld [vmem:[#allocation2 + $0xb3c] sm:$0xf]
    %v587 = vld [vmem:[#allocation2 + $0xb40] sm:$0xff]
    %v588 = vld [vmem:[#allocation2 + $0xb48] sm:$0xf]
    %v589 = vld [vmem:[#allocation2 + $0xb4c] sm:$0xff]
    %v590 = vld [vmem:[#allocation2 + $0xb54] sm:$0xf]
    %v591 = vld [vmem:[#allocation2 + $0xb58] sm:$0xff]
    %v592 = vld [vmem:[#allocation2 + $0xb60] sm:$0xf]
    %v593 = vld [vmem:[#allocation2 + $0xb64] sm:$0xff]
    %v594 = vld [vmem:[#allocation2 + $0xb6c] sm:$0xf]
    %v595 = vld [vmem:[#allocation2 + $0xb70] sm:$0xff]
    %v596 = vld [vmem:[#allocation2 + $0xb78] sm:$0xf]
    %v597 = vld [vmem:[#allocation2 + $0xb7c] sm:$0xff]
    %v598 = vld [vmem:[#allocation2 + $0xb84] sm:$0xf]
    %v599 = vld [vmem:[#allocation2 + $0xb88] sm:$0xff]
    %v600 = vld [vmem:[#allocation2 + $0xb90] sm:$0xf]
    %v601 = vld [vmem:[#allocation2 + $0xb94] sm:$0xff]
    %v602 = vld [vmem:[#allocation2 + $0xb9c] sm:$0xf]
    %v603 = vld [vmem:[#allocation2 + $0xba0] sm:$0xff]
    %v604 = vld [vmem:[#allocation2 + $0xba8] sm:$0xf]
    %v605 = vld [vmem:[#allocation2 + $0xbac] sm:$0xff]
    %v606 = vld [vmem:[#allocation2 + $0xbb4] sm:$0xf]
    %v607 = vld [vmem:[#allocation2 + $0xbb8] sm:$0xff]
    %v608 = vld [vmem:[#allocation2 + $0xbc0] sm:$0xf]
    %v609 = vld [vmem:[#allocation2 + $0xbc4] sm:$0xff]
    %v610 = vld [vmem:[#allocation2 + $0xbcc] sm:$0xf]
    %v611 = vld [vmem:[#allocation2 + $0xbd0] sm:$0xff]
    %v612 = vld [vmem:[#allocation2 + $0xbd8] sm:$0xf]
    %v613 = vld [vmem:[#allocation2 + $0xbdc] sm:$0xff]
    %v614 = vld [vmem:[#allocation2 + $0xbe4] sm:$0xf]
    %v615 = vld [vmem:[#allocation2 + $0xbe8] sm:$0xff]
    %v616 = vld [vmem:[#allocation2 + $0xbf0] sm:$0xf]
    %v617 = vld [vmem:[#allocation2 + $0xbf4] sm:$0xff]
    %v618 = vld [vmem:[#allocation2 + $0xbfc] sm:$0xf]
    %v619 = vld [vmem:[#allocation5] sm:$0x7]
    %v621 = vlaneseq
    %v622 = vshrl.u32 %v621, 7
    %v623 = vsub.s32 0, %v622
    %v624 = vrot.slane %v619, %v623
    %v625 = vlaneseq
    %v626 = vshrl.u32 %v625, 7
    %v627 = vsub.s32 1, %v626
    %v628 = vrot.slane %v619, %v627
    %v629 = vlaneseq
    %v630 = vshrl.u32 %v629, 7
    %v631 = vsub.s32 2, %v630
    %v632 = vrot.slane %v619, %v631
    %v1148 = vunpack.c.l.b16 %v107
    %v1149 = vunpack.c.h.b16 %v107
    %v1150 = vunpack.c.l.b16 %v108
    %v1151 = vunpack.c.l.b16 %v109
    %v1152 = vunpack.c.h.b16 %v109
    %v1153 = vunpack.c.l.b16 %v110
    %v1154 = vunpack.c.l.b16 %v111
    %v1155 = vunpack.c.h.b16 %v111
    %v1156 = vunpack.c.l.b16 %v112
    %v1157 = vunpack.c.l.b16 %v113
    %v1158 = vunpack.c.h.b16 %v113
    %v1159 = vunpack.c.l.b16 %v114
    %v1160 = vunpack.c.l.b16 %v115
    %v1161 = vunpack.c.h.b16 %v115
    %v1162 = vunpack.c.l.b16 %v116
    %v1163 = vunpack.c.l.b16 %v117
    %v1164 = vunpack.c.h.b16 %v117
    %v1165 = vunpack.c.l.b16 %v118
    %v1166 = vunpack.c.l.b16 %v119
    %v1167 = vunpack.c.h.b16 %v119
    %v1168 = vunpack.c.l.b16 %v120
    %v1169 = vunpack.c.l.b16 %v121
    %v1170 = vunpack.c.h.b16 %v121
    %v1171 = vunpack.c.l.b16 %v122
    %v1172 = vunpack.c.l.b16 %v123
    %v1173 = vunpack.c.h.b16 %v123
    %v1174 = vunpack.c.l.b16 %v124
    %v1175 = vunpack.c.l.b16 %v125
    %v1176 = vunpack.c.h.b16 %v125
    %v1177 = vunpack.c.l.b16 %v126
    %v1178 = vunpack.c.l.b16 %v127
    %v1179 = vunpack.c.h.b16 %v127
    %v1180 = vunpack.c.l.b16 %v128
    %v1181 = vunpack.c.l.b16 %v129
    %v1182 = vunpack.c.h.b16 %v129
    %v1183 = vunpack.c.l.b16 %v130
    %v1184 = vunpack.c.l.b16 %v131
    %v1185 = vunpack.c.h.b16 %v131
    %v1186 = vunpack.c.l.b16 %v132
    %v1187 = vunpack.c.l.b16 %v133
    %v1188 = vunpack.c.h.b16 %v133
    %v1189 = vunpack.c.l.b16 %v134
    %v1190 = vunpack.c.l.b16 %v135
    %v1191 = vunpack.c.h.b16 %v135
    %v1192 = vunpack.c.l.b16 %v136
    %v1193 = vunpack.c.l.b16 %v137
    %v1194 = vunpack.c.h.b16 %v137
    %v1195 = vunpack.c.l.b16 %v138
    %v1196 = vunpack.c.l.b16 %v139
    %v1197 = vunpack.c.h.b16 %v139
    %v1198 = vunpack.c.l.b16 %v140
    %v1199 = vunpack.c.l.b16 %v141
    %v1200 = vunpack.c.h.b16 %v141
    %v1201 = vunpack.c.l.b16 %v142
    %v1202 = vunpack.c.l.b16 %v143
    %v1203 = vunpack.c.h.b16 %v143
    %v1204 = vunpack.c.l.b16 %v144
    %v1205 = vunpack.c.l.b16 %v145
    %v1206 = vunpack.c.h.b16 %v145
    %v1207 = vunpack.c.l.b16 %v146
    %v1208 = vunpack.c.l.b16 %v147
    %v1209 = vunpack.c.h.b16 %v147
    %v1210 = vunpack.c.l.b16 %v148
    %v1211 = vunpack.c.l.b16 %v149
    %v1212 = vunpack.c.h.b16 %v149
    %v1213 = vunpack.c.l.b16 %v150
    %v1214 = vunpack.c.l.b16 %v151
    %v1215 = vunpack.c.h.b16 %v151
    %v1216 = vunpack.c.l.b16 %v152
    %v1217 = vunpack.c.l.b16 %v153
    %v1218 = vunpack.c.h.b16 %v153
    %v1219 = vunpack.c.l.b16 %v154
    %v1220 = vunpack.c.l.b16 %v155
    %v1221 = vunpack.c.h.b16 %v155
    %v1222 = vunpack.c.l.b16 %v156
    %v1223 = vunpack.c.l.b16 %v157
    %v1224 = vunpack.c.h.b16 %v157
    %v1225 = vunpack.c.l.b16 %v158
    %v1226 = vunpack.c.l.b16 %v159
    %v1227 = vunpack.c.h.b16 %v159
    %v1228 = vunpack.c.l.b16 %v160
    %v1229 = vunpack.c.l.b16 %v161
    %v1230 = vunpack.c.h.b16 %v161
    %v1231 = vunpack.c.l.b16 %v162
    %v1232 = vunpack.c.l.b16 %v163
    %v1233 = vunpack.c.h.b16 %v163
    %v1234 = vunpack.c.l.b16 %v164
    %v1235 = vunpack.c.l.b16 %v165
    %v1236 = vunpack.c.h.b16 %v165
    %v1237 = vunpack.c.l.b16 %v166
    %v1238 = vunpack.c.l.b16 %v167
    %v1239 = vunpack.c.h.b16 %v167
    %v1240 = vunpack.c.l.b16 %v168
    %v1241 = vunpack.c.l.b16 %v169
    %v1242 = vunpack.c.h.b16 %v169
    %v1243 = vunpack.c.l.b16 %v170
    %v1244 = vunpack.c.l.b16 %v171
    %v1245 = vunpack.c.h.b16 %v171
    %v1246 = vunpack.c.l.b16 %v172
    %v1247 = vunpack.c.l.b16 %v173
    %v1248 = vunpack.c.h.b16 %v173
    %v1249 = vunpack.c.l.b16 %v174
    %v1250 = vunpack.c.l.b16 %v175
    %v1251 = vunpack.c.h.b16 %v175
    %v1252 = vunpack.c.l.b16 %v176
    %v1253 = vunpack.c.l.b16 %v177
    %v1254 = vunpack.c.h.b16 %v177
    %v1255 = vunpack.c.l.b16 %v178
    %v1256 = vunpack.c.l.b16 %v179
    %v1257 = vunpack.c.h.b16 %v179
    %v1258 = vunpack.c.l.b16 %v180
    %v1259 = vunpack.c.l.b16 %v181
    %v1260 = vunpack.c.h.b16 %v181
    %v1261 = vunpack.c.l.b16 %v182
    %v1262 = vunpack.c.l.b16 %v183
    %v1263 = vunpack.c.h.b16 %v183
    %v1264 = vunpack.c.l.b16 %v184
    %v1265 = vunpack.c.l.b16 %v185
    %v1266 = vunpack.c.h.b16 %v185
    %v1267 = vunpack.c.l.b16 %v186
    %v1268 = vunpack.c.l.b16 %v187
    %v1269 = vunpack.c.h.b16 %v187
    %v1270 = vunpack.c.l.b16 %v188
    %v1271 = vunpack.c.l.b16 %v189
    %v1272 = vunpack.c.h.b16 %v189
    %v1273 = vunpack.c.l.b16 %v190
    %v1274 = vunpack.c.l.b16 %v191
    %v1275 = vunpack.c.h.b16 %v191
    %v1276 = vunpack.c.l.b16 %v192
    %v1277 = vunpack.c.l.b16 %v193
    %v1278 = vunpack.c.h.b16 %v193
    %v1279 = vunpack.c.l.b16 %v194
    %v1280 = vunpack.c.l.b16 %v195
    %v1281 = vunpack.c.h.b16 %v195
    %v1282 = vunpack.c.l.b16 %v196
    %v1283 = vunpack.c.l.b16 %v197
    %v1284 = vunpack.c.h.b16 %v197
    %v1285 = vunpack.c.l.b16 %v198
    %v1286 = vunpack.c.l.b16 %v199
    %v1287 = vunpack.c.h.b16 %v199
    %v1288 = vunpack.c.l.b16 %v200
    %v1289 = vunpack.c.l.b16 %v201
    %v1290 = vunpack.c.h.b16 %v201
    %v1291 = vunpack.c.l.b16 %v202
    %v1292 = vunpack.c.l.b16 %v203
    %v1293 = vunpack.c.h.b16 %v203
    %v1294 = vunpack.c.l.b16 %v204
    %v1295 = vunpack.c.l.b16 %v205
    %v1296 = vunpack.c.h.b16 %v205
    %v1297 = vunpack.c.l.b16 %v206
    %v1298 = vunpack.c.l.b16 %v207
    %v1299 = vunpack.c.h.b16 %v207
    %v1300 = vunpack.c.l.b16 %v208
    %v1301 = vunpack.c.l.b16 %v209
    %v1302 = vunpack.c.h.b16 %v209
    %v1303 = vunpack.c.l.b16 %v210
    %v1304 = vunpack.c.l.b16 %v211
    %v1305 = vunpack.c.h.b16 %v211
    %v1306 = vunpack.c.l.b16 %v212
    %v1307 = vunpack.c.l.b16 %v213
    %v1308 = vunpack.c.h.b16 %v213
    %v1309 = vunpack.c.l.b16 %v214
    %v1310 = vunpack.c.l.b16 %v215
    %v1311 = vunpack.c.h.b16 %v215
    %v1312 = vunpack.c.l.b16 %v216
    %v1313 = vunpack.c.l.b16 %v217
    %v1314 = vunpack.c.h.b16 %v217
    %v1315 = vunpack.c.l.b16 %v218
    %v1316 = vunpack.c.l.b16 %v219
    %v1317 = vunpack.c.h.b16 %v219
    %v1318 = vunpack.c.l.b16 %v220
    %v1319 = vunpack.c.l.b16 %v221
    %v1320 = vunpack.c.h.b16 %v221
    %v1321 = vunpack.c.l.b16 %v222
    %v1322 = vunpack.c.l.b16 %v223
    %v1323 = vunpack.c.h.b16 %v223
    %v1324 = vunpack.c.l.b16 %v224
    %v1325 = vunpack.c.l.b16 %v225
    %v1326 = vunpack.c.h.b16 %v225
    %v1327 = vunpack.c.l.b16 %v226
    %v1328 = vunpack.c.l.b16 %v227
    %v1329 = vunpack.c.h.b16 %v227
    %v1330 = vunpack.c.l.b16 %v228
    %v1331 = vunpack.c.l.b16 %v229
    %v1332 = vunpack.c.h.b16 %v229
    %v1333 = vunpack.c.l.b16 %v230
    %v1334 = vunpack.c.l.b16 %v231
    %v1335 = vunpack.c.h.b16 %v231
    %v1336 = vunpack.c.l.b16 %v232
    %v1337 = vunpack.c.l.b16 %v233
    %v1338 = vunpack.c.h.b16 %v233
    %v1339 = vunpack.c.l.b16 %v234
    %v1340 = vunpack.c.l.b16 %v235
    %v1341 = vunpack.c.h.b16 %v235
    %v1342 = vunpack.c.l.b16 %v236
    %v1343 = vunpack.c.l.b16 %v237
    %v1344 = vunpack.c.h.b16 %v237
    %v1345 = vunpack.c.l.b16 %v238
    %v1346 = vunpack.c.l.b16 %v239
    %v1347 = vunpack.c.h.b16 %v239
    %v1348 = vunpack.c.l.b16 %v240
    %v1349 = vunpack.c.l.b16 %v241
    %v1350 = vunpack.c.h.b16 %v241
    %v1351 = vunpack.c.l.b16 %v242
    %v1352 = vunpack.c.l.b16 %v243
    %v1353 = vunpack.c.h.b16 %v243
    %v1354 = vunpack.c.l.b16 %v244
    %v1355 = vunpack.c.l.b16 %v245
    %v1356 = vunpack.c.h.b16 %v245
    %v1357 = vunpack.c.l.b16 %v246
    %v1358 = vunpack.c.l.b16 %v247
    %v1359 = vunpack.c.h.b16 %v247
    %v1360 = vunpack.c.l.b16 %v248
    %v1361 = vunpack.c.l.b16 %v249
    %v1362 = vunpack.c.h.b16 %v249
    %v1363 = vunpack.c.l.b16 %v250
    %v1364 = vunpack.c.l.b16 %v251
    %v1365 = vunpack.c.h.b16 %v251
    %v1366 = vunpack.c.l.b16 %v252
    %v1367 = vunpack.c.l.b16 %v253
    %v1368 = vunpack.c.h.b16 %v253
    %v1369 = vunpack.c.l.b16 %v254
    %v1370 = vunpack.c.l.b16 %v255
    %v1371 = vunpack.c.h.b16 %v255
    %v1372 = vunpack.c.l.b16 %v256
    %v1373 = vunpack.c.l.b16 %v257
    %v1374 = vunpack.c.h.b16 %v257
    %v1375 = vunpack.c.l.b16 %v258
    %v1376 = vunpack.c.l.b16 %v259
    %v1377 = vunpack.c.h.b16 %v259
    %v1378 = vunpack.c.l.b16 %v260
    %v1379 = vunpack.c.l.b16 %v261
    %v1380 = vunpack.c.h.b16 %v261
    %v1381 = vunpack.c.l.b16 %v262
    %v1382 = vunpack.c.l.b16 %v263
    %v1383 = vunpack.c.h.b16 %v263
    %v1384 = vunpack.c.l.b16 %v264
    %v1385 = vunpack.c.l.b16 %v265
    %v1386 = vunpack.c.h.b16 %v265
    %v1387 = vunpack.c.l.b16 %v266
    %v1388 = vunpack.c.l.b16 %v267
    %v1389 = vunpack.c.h.b16 %v267
    %v1390 = vunpack.c.l.b16 %v268
    %v1391 = vunpack.c.l.b16 %v269
    %v1392 = vunpack.c.h.b16 %v269
    %v1393 = vunpack.c.l.b16 %v270
    %v1394 = vunpack.c.l.b16 %v271
    %v1395 = vunpack.c.h.b16 %v271
    %v1396 = vunpack.c.l.b16 %v272
    %v1397 = vunpack.c.l.b16 %v273
    %v1398 = vunpack.c.h.b16 %v273
    %v1399 = vunpack.c.l.b16 %v274
    %v1400 = vunpack.c.l.b16 %v275
    %v1401 = vunpack.c.h.b16 %v275
    %v1402 = vunpack.c.l.b16 %v276
    %v1403 = vunpack.c.l.b16 %v277
    %v1404 = vunpack.c.h.b16 %v277
    %v1405 = vunpack.c.l.b16 %v278
    %v1406 = vunpack.c.l.b16 %v279
    %v1407 = vunpack.c.h.b16 %v279
    %v1408 = vunpack.c.l.b16 %v280
    %v1409 = vunpack.c.l.b16 %v281
    %v1410 = vunpack.c.h.b16 %v281
    %v1411 = vunpack.c.l.b16 %v282
    %v1412 = vunpack.c.l.b16 %v283
    %v1413 = vunpack.c.h.b16 %v283
    %v1414 = vunpack.c.l.b16 %v284
    %v1415 = vunpack.c.l.b16 %v285
    %v1416 = vunpack.c.h.b16 %v285
    %v1417 = vunpack.c.l.b16 %v286
    %v1418 = vunpack.c.l.b16 %v287
    %v1419 = vunpack.c.h.b16 %v287
    %v1420 = vunpack.c.l.b16 %v288
    %v1421 = vunpack.c.l.b16 %v289
    %v1422 = vunpack.c.h.b16 %v289
    %v1423 = vunpack.c.l.b16 %v290
    %v1424 = vunpack.c.l.b16 %v291
    %v1425 = vunpack.c.h.b16 %v291
    %v1426 = vunpack.c.l.b16 %v292
    %v1427 = vunpack.c.l.b16 %v293
    %v1428 = vunpack.c.h.b16 %v293
    %v1429 = vunpack.c.l.b16 %v294
    %v1430 = vunpack.c.l.b16 %v295
    %v1431 = vunpack.c.h.b16 %v295
    %v1432 = vunpack.c.l.b16 %v296
    %v1433 = vunpack.c.l.b16 %v297
    %v1434 = vunpack.c.h.b16 %v297
    %v1435 = vunpack.c.l.b16 %v298
    %v1436 = vunpack.c.l.b16 %v299
    %v1437 = vunpack.c.h.b16 %v299
    %v1438 = vunpack.c.l.b16 %v300
    %v1439 = vunpack.c.l.b16 %v301
    %v1440 = vunpack.c.h.b16 %v301
    %v1441 = vunpack.c.l.b16 %v302
    %v1442 = vunpack.c.l.b16 %v303
    %v1443 = vunpack.c.h.b16 %v303
    %v1444 = vunpack.c.l.b16 %v304
    %v1445 = vunpack.c.l.b16 %v305
    %v1446 = vunpack.c.h.b16 %v305
    %v1447 = vunpack.c.l.b16 %v306
    %v1448 = vunpack.c.l.b16 %v307
    %v1449 = vunpack.c.h.b16 %v307
    %v1450 = vunpack.c.l.b16 %v308
    %v1451 = vunpack.c.l.b16 %v309
    %v1452 = vunpack.c.h.b16 %v309
    %v1453 = vunpack.c.l.b16 %v310
    %v1454 = vunpack.c.l.b16 %v311
    %v1455 = vunpack.c.h.b16 %v311
    %v1456 = vunpack.c.l.b16 %v312
    %v1457 = vunpack.c.l.b16 %v313
    %v1458 = vunpack.c.h.b16 %v313
    %v1459 = vunpack.c.l.b16 %v314
    %v1460 = vunpack.c.l.b16 %v315
    %v1461 = vunpack.c.h.b16 %v315
    %v1462 = vunpack.c.l.b16 %v316
    %v1463 = vunpack.c.l.b16 %v317
    %v1464 = vunpack.c.h.b16 %v317
    %v1465 = vunpack.c.l.b16 %v318
    %v1466 = vunpack.c.l.b16 %v319
    %v1467 = vunpack.c.h.b16 %v319
    %v1468 = vunpack.c.l.b16 %v320
    %v1469 = vunpack.c.l.b16 %v321
    %v1470 = vunpack.c.h.b16 %v321
    %v1471 = vunpack.c.l.b16 %v322
    %v1472 = vunpack.c.l.b16 %v323
    %v1473 = vunpack.c.h.b16 %v323
    %v1474 = vunpack.c.l.b16 %v324
    %v1475 = vunpack.c.l.b16 %v325
    %v1476 = vunpack.c.h.b16 %v325
    %v1477 = vunpack.c.l.b16 %v326
    %v1478 = vunpack.c.l.b16 %v327
    %v1479 = vunpack.c.h.b16 %v327
    %v1480 = vunpack.c.l.b16 %v328
    %v1481 = vunpack.c.l.b16 %v329
    %v1482 = vunpack.c.h.b16 %v329
    %v1483 = vunpack.c.l.b16 %v330
    %v1484 = vunpack.c.l.b16 %v331
    %v1485 = vunpack.c.h.b16 %v331
    %v1486 = vunpack.c.l.b16 %v332
    %v1487 = vunpack.c.l.b16 %v333
    %v1488 = vunpack.c.h.b16 %v333
    %v1489 = vunpack.c.l.b16 %v334
    %v1490 = vunpack.c.l.b16 %v335
    %v1491 = vunpack.c.h.b16 %v335
    %v1492 = vunpack.c.l.b16 %v336
    %v1493 = vunpack.c.l.b16 %v337
    %v1494 = vunpack.c.h.b16 %v337
    %v1495 = vunpack.c.l.b16 %v338
    %v1496 = vunpack.c.l.b16 %v339
    %v1497 = vunpack.c.h.b16 %v339
    %v1498 = vunpack.c.l.b16 %v340
    %v1499 = vunpack.c.l.b16 %v341
    %v1500 = vunpack.c.h.b16 %v341
    %v1501 = vunpack.c.l.b16 %v342
    %v1502 = vunpack.c.l.b16 %v343
    %v1503 = vunpack.c.h.b16 %v343
    %v1504 = vunpack.c.l.b16 %v344
    %v1505 = vunpack.c.l.b16 %v345
    %v1506 = vunpack.c.h.b16 %v345
    %v1507 = vunpack.c.l.b16 %v346
    %v1508 = vunpack.c.l.b16 %v347
    %v1509 = vunpack.c.h.b16 %v347
    %v1510 = vunpack.c.l.b16 %v348
    %v1511 = vunpack.c.l.b16 %v349
    %v1512 = vunpack.c.h.b16 %v349
    %v1513 = vunpack.c.l.b16 %v350
    %v1514 = vunpack.c.l.b16 %v351
    %v1515 = vunpack.c.h.b16 %v351
    %v1516 = vunpack.c.l.b16 %v352
    %v1517 = vunpack.c.l.b16 %v353
    %v1518 = vunpack.c.h.b16 %v353
    %v1519 = vunpack.c.l.b16 %v354
    %v1520 = vunpack.c.l.b16 %v355
    %v1521 = vunpack.c.h.b16 %v355
    %v1522 = vunpack.c.l.b16 %v356
    %v1523 = vunpack.c.l.b16 %v357
    %v1524 = vunpack.c.h.b16 %v357
    %v1525 = vunpack.c.l.b16 %v358
    %v1526 = vunpack.c.l.b16 %v359
    %v1527 = vunpack.c.h.b16 %v359
    %v1528 = vunpack.c.l.b16 %v360
    %v1529 = vunpack.c.l.b16 %v361
    %v1530 = vunpack.c.h.b16 %v361
    %v1531 = vunpack.c.l.b16 %v362
    %v1532 = vunpack.c.l.b16 %v363
    %v1533 = vunpack.c.h.b16 %v363
    %v1534 = vunpack.c.l.b16 %v364
    %v1535 = vunpack.c.l.b16 %v365
    %v1536 = vunpack.c.h.b16 %v365
    %v1537 = vunpack.c.l.b16 %v366
    %v1538 = vunpack.c.l.b16 %v367
    %v1539 = vunpack.c.h.b16 %v367
    %v1540 = vunpack.c.l.b16 %v368
    %v1541 = vunpack.c.l.b16 %v369
    %v1542 = vunpack.c.h.b16 %v369
    %v1543 = vunpack.c.l.b16 %v370
    %v1544 = vunpack.c.l.b16 %v371
    %v1545 = vunpack.c.h.b16 %v371
    %v1546 = vunpack.c.l.b16 %v372
    %v1547 = vunpack.c.l.b16 %v373
    %v1548 = vunpack.c.h.b16 %v373
    %v1549 = vunpack.c.l.b16 %v374
    %v1550 = vunpack.c.l.b16 %v375
    %v1551 = vunpack.c.h.b16 %v375
    %v1552 = vunpack.c.l.b16 %v376
    %v1553 = vunpack.c.l.b16 %v377
    %v1554 = vunpack.c.h.b16 %v377
    %v1555 = vunpack.c.l.b16 %v378
    %v1556 = vunpack.c.l.b16 %v379
    %v1557 = vunpack.c.h.b16 %v379
    %v1558 = vunpack.c.l.b16 %v380
    %v1559 = vunpack.c.l.b16 %v381
    %v1560 = vunpack.c.h.b16 %v381
    %v1561 = vunpack.c.l.b16 %v382
    %v1562 = vunpack.c.l.b16 %v383
    %v1563 = vunpack.c.h.b16 %v383
    %v1564 = vunpack.c.l.b16 %v384
    %v1565 = vunpack.c.l.b16 %v385
    %v1566 = vunpack.c.h.b16 %v385
    %v1567 = vunpack.c.l.b16 %v386
    %v1568 = vunpack.c.l.b16 %v387
    %v1569 = vunpack.c.h.b16 %v387
    %v1570 = vunpack.c.l.b16 %v388
    %v1571 = vunpack.c.l.b16 %v389
    %v1572 = vunpack.c.h.b16 %v389
    %v1573 = vunpack.c.l.b16 %v390
    %v1574 = vunpack.c.l.b16 %v391
    %v1575 = vunpack.c.h.b16 %v391
    %v1576 = vunpack.c.l.b16 %v392
    %v1577 = vunpack.c.l.b16 %v393
    %v1578 = vunpack.c.h.b16 %v393
    %v1579 = vunpack.c.l.b16 %v394
    %v1580 = vunpack.c.l.b16 %v395
    %v1581 = vunpack.c.h.b16 %v395
    %v1582 = vunpack.c.l.b16 %v396
    %v1583 = vunpack.c.l.b16 %v397
    %v1584 = vunpack.c.h.b16 %v397
    %v1585 = vunpack.c.l.b16 %v398
    %v1586 = vunpack.c.l.b16 %v399
    %v1587 = vunpack.c.h.b16 %v399
    %v1588 = vunpack.c.l.b16 %v400
    %v1589 = vunpack.c.l.b16 %v401
    %v1590 = vunpack.c.h.b16 %v401
    %v1591 = vunpack.c.l.b16 %v402
    %v1592 = vunpack.c.l.b16 %v403
    %v1593 = vunpack.c.h.b16 %v403
    %v1594 = vunpack.c.l.b16 %v404
    %v1595 = vunpack.c.l.b16 %v405
    %v1596 = vunpack.c.h.b16 %v405
    %v1597 = vunpack.c.l.b16 %v406
    %v1598 = vunpack.c.l.b16 %v407
    %v1599 = vunpack.c.h.b16 %v407
    %v1600 = vunpack.c.l.b16 %v408
    %v1601 = vunpack.c.l.b16 %v409
    %v1602 = vunpack.c.h.b16 %v409
    %v1603 = vunpack.c.l.b16 %v410
    %v1604 = vunpack.c.l.b16 %v411
    %v1605 = vunpack.c.h.b16 %v411
    %v1606 = vunpack.c.l.b16 %v412
    %v1607 = vunpack.c.l.b16 %v413
    %v1608 = vunpack.c.h.b16 %v413
    %v1609 = vunpack.c.l.b16 %v414
    %v1610 = vunpack.c.l.b16 %v415
    %v1611 = vunpack.c.h.b16 %v415
    %v1612 = vunpack.c.l.b16 %v416
    %v1613 = vunpack.c.l.b16 %v417
    %v1614 = vunpack.c.h.b16 %v417
    %v1615 = vunpack.c.l.b16 %v418
    %v1616 = vunpack.c.l.b16 %v419
    %v1617 = vunpack.c.h.b16 %v419
    %v1618 = vunpack.c.l.b16 %v420
    %v1619 = vunpack.c.l.b16 %v421
    %v1620 = vunpack.c.h.b16 %v421
    %v1621 = vunpack.c.l.b16 %v422
    %v1622 = vunpack.c.l.b16 %v423
    %v1623 = vunpack.c.h.b16 %v423
    %v1624 = vunpack.c.l.b16 %v424
    %v1625 = vunpack.c.l.b16 %v425
    %v1626 = vunpack.c.h.b16 %v425
    %v1627 = vunpack.c.l.b16 %v426
    %v1628 = vunpack.c.l.b16 %v427
    %v1629 = vunpack.c.h.b16 %v427
    %v1630 = vunpack.c.l.b16 %v428
    %v1631 = vunpack.c.l.b16 %v429
    %v1632 = vunpack.c.h.b16 %v429
    %v1633 = vunpack.c.l.b16 %v430
    %v1634 = vunpack.c.l.b16 %v431
    %v1635 = vunpack.c.h.b16 %v431
    %v1636 = vunpack.c.l.b16 %v432
    %v1637 = vunpack.c.l.b16 %v433
    %v1638 = vunpack.c.h.b16 %v433
    %v1639 = vunpack.c.l.b16 %v434
    %v1640 = vunpack.c.l.b16 %v435
    %v1641 = vunpack.c.h.b16 %v435
    %v1642 = vunpack.c.l.b16 %v436
    %v1643 = vunpack.c.l.b16 %v437
    %v1644 = vunpack.c.h.b16 %v437
    %v1645 = vunpack.c.l.b16 %v438
    %v1646 = vunpack.c.l.b16 %v439
    %v1647 = vunpack.c.h.b16 %v439
    %v1648 = vunpack.c.l.b16 %v440
    %v1649 = vunpack.c.l.b16 %v441
    %v1650 = vunpack.c.h.b16 %v441
    %v1651 = vunpack.c.l.b16 %v442
    %v1652 = vunpack.c.l.b16 %v443
    %v1653 = vunpack.c.h.b16 %v443
    %v1654 = vunpack.c.l.b16 %v444
    %v1655 = vunpack.c.l.b16 %v445
    %v1656 = vunpack.c.h.b16 %v445
    %v1657 = vunpack.c.l.b16 %v446
    %v1658 = vunpack.c.l.b16 %v447
    %v1659 = vunpack.c.h.b16 %v447
    %v1660 = vunpack.c.l.b16 %v448
    %v1661 = vunpack.c.l.b16 %v449
    %v1662 = vunpack.c.h.b16 %v449
    %v1663 = vunpack.c.l.b16 %v450
    %v1664 = vunpack.c.l.b16 %v451
    %v1665 = vunpack.c.h.b16 %v451
    %v1666 = vunpack.c.l.b16 %v452
    %v1667 = vunpack.c.l.b16 %v453
    %v1668 = vunpack.c.h.b16 %v453
    %v1669 = vunpack.c.l.b16 %v454
    %v1670 = vunpack.c.l.b16 %v455
    %v1671 = vunpack.c.h.b16 %v455
    %v1672 = vunpack.c.l.b16 %v456
    %v1673 = vunpack.c.l.b16 %v457
    %v1674 = vunpack.c.h.b16 %v457
    %v1675 = vunpack.c.l.b16 %v458
    %v1676 = vunpack.c.l.b16 %v459
    %v1677 = vunpack.c.h.b16 %v459
    %v1678 = vunpack.c.l.b16 %v460
    %v1679 = vunpack.c.l.b16 %v461
    %v1680 = vunpack.c.h.b16 %v461
    %v1681 = vunpack.c.l.b16 %v462
    %v1682 = vunpack.c.l.b16 %v463
    %v1683 = vunpack.c.h.b16 %v463
    %v1684 = vunpack.c.l.b16 %v464
    %v1685 = vunpack.c.l.b16 %v465
    %v1686 = vunpack.c.h.b16 %v465
    %v1687 = vunpack.c.l.b16 %v466
    %v1688 = vunpack.c.l.b16 %v467
    %v1689 = vunpack.c.h.b16 %v467
    %v1690 = vunpack.c.l.b16 %v468
    %v1691 = vunpack.c.l.b16 %v469
    %v1692 = vunpack.c.h.b16 %v469
    %v1693 = vunpack.c.l.b16 %v470
    %v1694 = vunpack.c.l.b16 %v471
    %v1695 = vunpack.c.h.b16 %v471
    %v1696 = vunpack.c.l.b16 %v472
    %v1697 = vunpack.c.l.b16 %v473
    %v1698 = vunpack.c.h.b16 %v473
    %v1699 = vunpack.c.l.b16 %v474
    %v1700 = vunpack.c.l.b16 %v475
    %v1701 = vunpack.c.h.b16 %v475
    %v1702 = vunpack.c.l.b16 %v476
    %v1703 = vunpack.c.l.b16 %v477
    %v1704 = vunpack.c.h.b16 %v477
    %v1705 = vunpack.c.l.b16 %v478
    %v1706 = vunpack.c.l.b16 %v479
    %v1707 = vunpack.c.h.b16 %v479
    %v1708 = vunpack.c.l.b16 %v480
    %v1709 = vunpack.c.l.b16 %v481
    %v1710 = vunpack.c.h.b16 %v481
    %v1711 = vunpack.c.l.b16 %v482
    %v1712 = vunpack.c.l.b16 %v483
    %v1713 = vunpack.c.h.b16 %v483
    %v1714 = vunpack.c.l.b16 %v484
    %v1715 = vunpack.c.l.b16 %v485
    %v1716 = vunpack.c.h.b16 %v485
    %v1717 = vunpack.c.l.b16 %v486
    %v1718 = vunpack.c.l.b16 %v487
    %v1719 = vunpack.c.h.b16 %v487
    %v1720 = vunpack.c.l.b16 %v488
    %v1721 = vunpack.c.l.b16 %v489
    %v1722 = vunpack.c.h.b16 %v489
    %v1723 = vunpack.c.l.b16 %v490
    %v1724 = vunpack.c.l.b16 %v491
    %v1725 = vunpack.c.h.b16 %v491
    %v1726 = vunpack.c.l.b16 %v492
    %v1727 = vunpack.c.l.b16 %v493
    %v1728 = vunpack.c.h.b16 %v493
    %v1729 = vunpack.c.l.b16 %v494
    %v1730 = vunpack.c.l.b16 %v495
    %v1731 = vunpack.c.h.b16 %v495
    %v1732 = vunpack.c.l.b16 %v496
    %v1733 = vunpack.c.l.b16 %v497
    %v1734 = vunpack.c.h.b16 %v497
    %v1735 = vunpack.c.l.b16 %v498
    %v1736 = vunpack.c.l.b16 %v499
    %v1737 = vunpack.c.h.b16 %v499
    %v1738 = vunpack.c.l.b16 %v500
    %v1739 = vunpack.c.l.b16 %v501
    %v1740 = vunpack.c.h.b16 %v501
    %v1741 = vunpack.c.l.b16 %v502
    %v1742 = vunpack.c.l.b16 %v503
    %v1743 = vunpack.c.h.b16 %v503
    %v1744 = vunpack.c.l.b16 %v504
    %v1745 = vunpack.c.l.b16 %v505
    %v1746 = vunpack.c.h.b16 %v505
    %v1747 = vunpack.c.l.b16 %v506
    %v1748 = vunpack.c.l.b16 %v507
    %v1749 = vunpack.c.h.b16 %v507
    %v1750 = vunpack.c.l.b16 %v508
    %v1751 = vunpack.c.l.b16 %v509
    %v1752 = vunpack.c.h.b16 %v509
    %v1753 = vunpack.c.l.b16 %v510
    %v1754 = vunpack.c.l.b16 %v511
    %v1755 = vunpack.c.h.b16 %v511
    %v1756 = vunpack.c.l.b16 %v512
    %v1757 = vunpack.c.l.b16 %v513
    %v1758 = vunpack.c.h.b16 %v513
    %v1759 = vunpack.c.l.b16 %v514
    %v1760 = vunpack.c.l.b16 %v515
    %v1761 = vunpack.c.h.b16 %v515
    %v1762 = vunpack.c.l.b16 %v516
    %v1763 = vunpack.c.l.b16 %v517
    %v1764 = vunpack.c.h.b16 %v517
    %v1765 = vunpack.c.l.b16 %v518
    %v1766 = vunpack.c.l.b16 %v519
    %v1767 = vunpack.c.h.b16 %v519
    %v1768 = vunpack.c.l.b16 %v520
    %v1769 = vunpack.c.l.b16 %v521
    %v1770 = vunpack.c.h.b16 %v521
    %v1771 = vunpack.c.l.b16 %v522
    %v1772 = vunpack.c.l.b16 %v523
    %v1773 = vunpack.c.h.b16 %v523
    %v1774 = vunpack.c.l.b16 %v524
    %v1775 = vunpack.c.l.b16 %v525
    %v1776 = vunpack.c.h.b16 %v525
    %v1777 = vunpack.c.l.b16 %v526
    %v1778 = vunpack.c.l.b16 %v527
    %v1779 = vunpack.c.h.b16 %v527
    %v1780 = vunpack.c.l.b16 %v528
    %v1781 = vunpack.c.l.b16 %v529
    %v1782 = vunpack.c.h.b16 %v529
    %v1783 = vunpack.c.l.b16 %v530
    %v1784 = vunpack.c.l.b16 %v531
    %v1785 = vunpack.c.h.b16 %v531
    %v1786 = vunpack.c.l.b16 %v532
    %v1787 = vunpack.c.l.b16 %v533
    %v1788 = vunpack.c.h.b16 %v533
    %v1789 = vunpack.c.l.b16 %v534
    %v1790 = vunpack.c.l.b16 %v535
    %v1791 = vunpack.c.h.b16 %v535
    %v1792 = vunpack.c.l.b16 %v536
    %v1793 = vunpack.c.l.b16 %v537
    %v1794 = vunpack.c.h.b16 %v537
    %v1795 = vunpack.c.l.b16 %v538
    %v1796 = vunpack.c.l.b16 %v539
    %v1797 = vunpack.c.h.b16 %v539
    %v1798 = vunpack.c.l.b16 %v540
    %v1799 = vunpack.c.l.b16 %v541
    %v1800 = vunpack.c.h.b16 %v541
    %v1801 = vunpack.c.l.b16 %v542
    %v1802 = vunpack.c.l.b16 %v543
    %v1803 = vunpack.c.h.b16 %v543
    %v1804 = vunpack.c.l.b16 %v544
    %v1805 = vunpack.c.l.b16 %v545
    %v1806 = vunpack.c.h.b16 %v545
    %v1807 = vunpack.c.l.b16 %v546
    %v1808 = vunpack.c.l.b16 %v547
    %v1809 = vunpack.c.h.b16 %v547
    %v1810 = vunpack.c.l.b16 %v548
    %v1811 = vunpack.c.l.b16 %v549
    %v1812 = vunpack.c.h.b16 %v549
    %v1813 = vunpack.c.l.b16 %v550
    %v1814 = vunpack.c.l.b16 %v551
    %v1815 = vunpack.c.h.b16 %v551
    %v1816 = vunpack.c.l.b16 %v552
    %v1817 = vunpack.c.l.b16 %v553
    %v1818 = vunpack.c.h.b16 %v553
    %v1819 = vunpack.c.l.b16 %v554
    %v1820 = vunpack.c.l.b16 %v555
    %v1821 = vunpack.c.h.b16 %v555
    %v1822 = vunpack.c.l.b16 %v556
    %v1823 = vunpack.c.l.b16 %v557
    %v1824 = vunpack.c.h.b16 %v557
    %v1825 = vunpack.c.l.b16 %v558
    %v1826 = vunpack.c.l.b16 %v559
    %v1827 = vunpack.c.h.b16 %v559
    %v1828 = vunpack.c.l.b16 %v560
    %v1829 = vunpack.c.l.b16 %v561
    %v1830 = vunpack.c.h.b16 %v561
    %v1831 = vunpack.c.l.b16 %v562
    %v1832 = vunpack.c.l.b16 %v563
    %v1833 = vunpack.c.h.b16 %v563
    %v1834 = vunpack.c.l.b16 %v564
    %v1835 = vunpack.c.l.b16 %v565
    %v1836 = vunpack.c.h.b16 %v565
    %v1837 = vunpack.c.l.b16 %v566
    %v1838 = vunpack.c.l.b16 %v567
    %v1839 = vunpack.c.h.b16 %v567
    %v1840 = vunpack.c.l.b16 %v568
    %v1841 = vunpack.c.l.b16 %v569
    %v1842 = vunpack.c.h.b16 %v569
    %v1843 = vunpack.c.l.b16 %v570
    %v1844 = vunpack.c.l.b16 %v571
    %v1845 = vunpack.c.h.b16 %v571
    %v1846 = vunpack.c.l.b16 %v572
    %v1847 = vunpack.c.l.b16 %v573
    %v1848 = vunpack.c.h.b16 %v573
    %v1849 = vunpack.c.l.b16 %v574
    %v1850 = vunpack.c.l.b16 %v575
    %v1851 = vunpack.c.h.b16 %v575
    %v1852 = vunpack.c.l.b16 %v576
    %v1853 = vunpack.c.l.b16 %v577
    %v1854 = vunpack.c.h.b16 %v577
    %v1855 = vunpack.c.l.b16 %v578
    %v1856 = vunpack.c.l.b16 %v579
    %v1857 = vunpack.c.h.b16 %v579
    %v1858 = vunpack.c.l.b16 %v580
    %v1859 = vunpack.c.l.b16 %v581
    %v1860 = vunpack.c.h.b16 %v581
    %v1861 = vunpack.c.l.b16 %v582
    %v1862 = vunpack.c.l.b16 %v583
    %v1863 = vunpack.c.h.b16 %v583
    %v1864 = vunpack.c.l.b16 %v584
    %v1865 = vunpack.c.l.b16 %v585
    %v1866 = vunpack.c.h.b16 %v585
    %v1867 = vunpack.c.l.b16 %v586
    %v1868 = vunpack.c.l.b16 %v587
    %v1869 = vunpack.c.h.b16 %v587
    %v1870 = vunpack.c.l.b16 %v588
    %v1871 = vunpack.c.l.b16 %v589
    %v1872 = vunpack.c.h.b16 %v589
    %v1873 = vunpack.c.l.b16 %v590
    %v1874 = vunpack.c.l.b16 %v591
    %v1875 = vunpack.c.h.b16 %v591
    %v1876 = vunpack.c.l.b16 %v592
    %v1877 = vunpack.c.l.b16 %v593
    %v1878 = vunpack.c.h.b16 %v593
    %v1879 = vunpack.c.l.b16 %v594
    %v1880 = vunpack.c.l.b16 %v595
    %v1881 = vunpack.c.h.b16 %v595
    %v1882 = vunpack.c.l.b16 %v596
    %v1883 = vunpack.c.l.b16 %v597
    %v1884 = vunpack.c.h.b16 %v597
    %v1885 = vunpack.c.l.b16 %v598
    %v1886 = vunpack.c.l.b16 %v599
    %v1887 = vunpack.c.h.b16 %v599
    %v1888 = vunpack.c.l.b16 %v600
    %v1889 = vunpack.c.l.b16 %v601
    %v1890 = vunpack.c.h.b16 %v601
    %v1891 = vunpack.c.l.b16 %v602
    %v1892 = vunpack.c.l.b16 %v603
    %v1893 = vunpack.c.h.b16 %v603
    %v1894 = vunpack.c.l.b16 %v604
    %v1895 = vunpack.c.l.b16 %v605
    %v1896 = vunpack.c.h.b16 %v605
    %v1897 = vunpack.c.l.b16 %v606
    %v1898 = vunpack.c.l.b16 %v607
    %v1899 = vunpack.c.h.b16 %v607
    %v1900 = vunpack.c.l.b16 %v608
    %v1901 = vunpack.c.l.b16 %v609
    %v1902 = vunpack.c.h.b16 %v609
    %v1903 = vunpack.c.l.b16 %v610
    %v1904 = vunpack.c.l.b16 %v611
    %v1905 = vunpack.c.h.b16 %v611
    %v1906 = vunpack.c.l.b16 %v612
    %v1907 = vunpack.c.l.b16 %v613
    %v1908 = vunpack.c.h.b16 %v613
    %v1909 = vunpack.c.l.b16 %v614
    %v1910 = vunpack.c.l.b16 %v615
    %v1911 = vunpack.c.h.b16 %v615
    %v1912 = vunpack.c.l.b16 %v616
    %v1913 = vunpack.c.l.b16 %v617
    %v1914 = vunpack.c.h.b16 %v617
    %v1915 = vunpack.c.l.b16 %v618
    %v1916 = vpack.c.b16 %v1151, %v1148
    %v1917 = vpack.c.b16 %v1152, %v1149
    %v1918 = vpack.c.b16 %v1153, %v1150
    %v1919 = vpack.c.b16 %v1157, %v1154
    %v1920 = vpack.c.b16 %v1158, %v1155
    %v1921 = vpack.c.b16 %v1159, %v1156
    %v1922 = vpack.c.b16 %v1163, %v1160
    %v1923 = vpack.c.b16 %v1164, %v1161
    %v1924 = vpack.c.b16 %v1165, %v1162
    %v1925 = vpack.c.b16 %v1169, %v1166
    %v1926 = vpack.c.b16 %v1170, %v1167
    %v1927 = vpack.c.b16 %v1171, %v1168
    %v1928 = vpack.c.b16 %v1175, %v1172
    %v1929 = vpack.c.b16 %v1176, %v1173
    %v1930 = vpack.c.b16 %v1177, %v1174
    %v1931 = vpack.c.b16 %v1181, %v1178
    %v1932 = vpack.c.b16 %v1182, %v1179
    %v1933 = vpack.c.b16 %v1183, %v1180
    %v1934 = vpack.c.b16 %v1187, %v1184
    %v1935 = vpack.c.b16 %v1188, %v1185
    %v1936 = vpack.c.b16 %v1189, %v1186
    %v1937 = vpack.c.b16 %v1193, %v1190
    %v1938 = vpack.c.b16 %v1194, %v1191
    %v1939 = vpack.c.b16 %v1195, %v1192
    %v1940 = vpack.c.b16 %v1199, %v1196
    %v1941 = vpack.c.b16 %v1200, %v1197
    %v1942 = vpack.c.b16 %v1201, %v1198
    %v1943 = vpack.c.b16 %v1205, %v1202
    %v1944 = vpack.c.b16 %v1206, %v1203
    %v1945 = vpack.c.b16 %v1207, %v1204
    %v1946 = vpack.c.b16 %v1211, %v1208
    %v1947 = vpack.c.b16 %v1212, %v1209
    %v1948 = vpack.c.b16 %v1213, %v1210
    %v1949 = vpack.c.b16 %v1217, %v1214
    %v1950 = vpack.c.b16 %v1218, %v1215
    %v1951 = vpack.c.b16 %v1219, %v1216
    %v1952 = vpack.c.b16 %v1223, %v1220
    %v1953 = vpack.c.b16 %v1224, %v1221
    %v1954 = vpack.c.b16 %v1225, %v1222
    %v1955 = vpack.c.b16 %v1229, %v1226
    %v1956 = vpack.c.b16 %v1230, %v1227
    %v1957 = vpack.c.b16 %v1231, %v1228
    %v1958 = vpack.c.b16 %v1235, %v1232
    %v1959 = vpack.c.b16 %v1236, %v1233
    %v1960 = vpack.c.b16 %v1237, %v1234
    %v1961 = vpack.c.b16 %v1241, %v1238
    %v1962 = vpack.c.b16 %v1242, %v1239
    %v1963 = vpack.c.b16 %v1243, %v1240
    %v1964 = vpack.c.b16 %v1247, %v1244
    %v1965 = vpack.c.b16 %v1248, %v1245
    %v1966 = vpack.c.b16 %v1249, %v1246
    %v1967 = vpack.c.b16 %v1253, %v1250
    %v1968 = vpack.c.b16 %v1254, %v1251
    %v1969 = vpack.c.b16 %v1255, %v1252
    %v1970 = vpack.c.b16 %v1259, %v1256
    %v1971 = vpack.c.b16 %v1260, %v1257
    %v1972 = vpack.c.b16 %v1261, %v1258
    %v1973 = vpack.c.b16 %v1265, %v1262
    %v1974 = vpack.c.b16 %v1266, %v1263
    %v1975 = vpack.c.b16 %v1267, %v1264
    %v1976 = vpack.c.b16 %v1271, %v1268
    %v1977 = vpack.c.b16 %v1272, %v1269
    %v1978 = vpack.c.b16 %v1273, %v1270
    %v1979 = vpack.c.b16 %v1277, %v1274
    %v1980 = vpack.c.b16 %v1278, %v1275
    %v1981 = vpack.c.b16 %v1279, %v1276
    %v1982 = vpack.c.b16 %v1283, %v1280
    %v1983 = vpack.c.b16 %v1284, %v1281
    %v1984 = vpack.c.b16 %v1285, %v1282
    %v1985 = vpack.c.b16 %v1289, %v1286
    %v1986 = vpack.c.b16 %v1290, %v1287
    %v1987 = vpack.c.b16 %v1291, %v1288
    %v1988 = vpack.c.b16 %v1295, %v1292
    %v1989 = vpack.c.b16 %v1296, %v1293
    %v1990 = vpack.c.b16 %v1297, %v1294
    %v1991 = vpack.c.b16 %v1301, %v1298
    %v1992 = vpack.c.b16 %v1302, %v1299
    %v1993 = vpack.c.b16 %v1303, %v1300
    %v1994 = vpack.c.b16 %v1307, %v1304
    %v1995 = vpack.c.b16 %v1308, %v1305
    %v1996 = vpack.c.b16 %v1309, %v1306
    %v1997 = vpack.c.b16 %v1313, %v1310
    %v1998 = vpack.c.b16 %v1314, %v1311
    %v1999 = vpack.c.b16 %v1315, %v1312
    %v2000 = vpack.c.b16 %v1319, %v1316
    %v2001 = vpack.c.b16 %v1320, %v1317
    %v2002 = vpack.c.b16 %v1321, %v1318
    %v2003 = vpack.c.b16 %v1325, %v1322
    %v2004 = vpack.c.b16 %v1326, %v1323
    %v2005 = vpack.c.b16 %v1327, %v1324
    %v2006 = vpack.c.b16 %v1331, %v1328
    %v2007 = vpack.c.b16 %v1332, %v1329
    %v2008 = vpack.c.b16 %v1333, %v1330
    %v2009 = vpack.c.b16 %v1337, %v1334
    %v2010 = vpack.c.b16 %v1338, %v1335
    %v2011 = vpack.c.b16 %v1339, %v1336
    %v2012 = vpack.c.b16 %v1343, %v1340
    %v2013 = vpack.c.b16 %v1344, %v1341
    %v2014 = vpack.c.b16 %v1345, %v1342
    %v2015 = vpack.c.b16 %v1349, %v1346
    %v2016 = vpack.c.b16 %v1350, %v1347
    %v2017 = vpack.c.b16 %v1351, %v1348
    %v2018 = vpack.c.b16 %v1355, %v1352
    %v2019 = vpack.c.b16 %v1356, %v1353
    %v2020 = vpack.c.b16 %v1357, %v1354
    %v2021 = vpack.c.b16 %v1361, %v1358
    %v2022 = vpack.c.b16 %v1362, %v1359
    %v2023 = vpack.c.b16 %v1363, %v1360
    %v2024 = vpack.c.b16 %v1367, %v1364
    %v2025 = vpack.c.b16 %v1368, %v1365
    %v2026 = vpack.c.b16 %v1369, %v1366
    %v2027 = vpack.c.b16 %v1373, %v1370
    %v2028 = vpack.c.b16 %v1374, %v1371
    %v2029 = vpack.c.b16 %v1375, %v1372
    %v2030 = vpack.c.b16 %v1379, %v1376
    %v2031 = vpack.c.b16 %v1380, %v1377
    %v2032 = vpack.c.b16 %v1381, %v1378
    %v2033 = vpack.c.b16 %v1385, %v1382
    %v2034 = vpack.c.b16 %v1386, %v1383
    %v2035 = vpack.c.b16 %v1387, %v1384
    %v2036 = vpack.c.b16 %v1391, %v1388
    %v2037 = vpack.c.b16 %v1392, %v1389
    %v2038 = vpack.c.b16 %v1393, %v1390
    %v2039 = vpack.c.b16 %v1397, %v1394
    %v2040 = vpack.c.b16 %v1398, %v1395
    %v2041 = vpack.c.b16 %v1399, %v1396
    %v2042 = vpack.c.b16 %v1403, %v1400
    %v2043 = vpack.c.b16 %v1404, %v1401
    %v2044 = vpack.c.b16 %v1405, %v1402
    %v2045 = vpack.c.b16 %v1409, %v1406
    %v2046 = vpack.c.b16 %v1410, %v1407
    %v2047 = vpack.c.b16 %v1411, %v1408
    %v2048 = vpack.c.b16 %v1415, %v1412
    %v2049 = vpack.c.b16 %v1416, %v1413
    %v2050 = vpack.c.b16 %v1417, %v1414
    %v2051 = vpack.c.b16 %v1421, %v1418
    %v2052 = vpack.c.b16 %v1422, %v1419
    %v2053 = vpack.c.b16 %v1423, %v1420
    %v2054 = vpack.c.b16 %v1427, %v1424
    %v2055 = vpack.c.b16 %v1428, %v1425
    %v2056 = vpack.c.b16 %v1429, %v1426
    %v2057 = vpack.c.b16 %v1433, %v1430
    %v2058 = vpack.c.b16 %v1434, %v1431
    %v2059 = vpack.c.b16 %v1435, %v1432
    %v2060 = vpack.c.b16 %v1439, %v1436
    %v2061 = vpack.c.b16 %v1440, %v1437
    %v2062 = vpack.c.b16 %v1441, %v1438
    %v2063 = vpack.c.b16 %v1445, %v1442
    %v2064 = vpack.c.b16 %v1446, %v1443
    %v2065 = vpack.c.b16 %v1447, %v1444
    %v2066 = vpack.c.b16 %v1451, %v1448
    %v2067 = vpack.c.b16 %v1452, %v1449
    %v2068 = vpack.c.b16 %v1453, %v1450
    %v2069 = vpack.c.b16 %v1457, %v1454
    %v2070 = vpack.c.b16 %v1458, %v1455
    %v2071 = vpack.c.b16 %v1459, %v1456
    %v2072 = vpack.c.b16 %v1463, %v1460
    %v2073 = vpack.c.b16 %v1464, %v1461
    %v2074 = vpack.c.b16 %v1465, %v1462
    %v2075 = vpack.c.b16 %v1469, %v1466
    %v2076 = vpack.c.b16 %v1470, %v1467
    %v2077 = vpack.c.b16 %v1471, %v1468
    %v2078 = vpack.c.b16 %v1475, %v1472
    %v2079 = vpack.c.b16 %v1476, %v1473
    %v2080 = vpack.c.b16 %v1477, %v1474
    %v2081 = vpack.c.b16 %v1481, %v1478
    %v2082 = vpack.c.b16 %v1482, %v1479
    %v2083 = vpack.c.b16 %v1483, %v1480
    %v2084 = vpack.c.b16 %v1487, %v1484
    %v2085 = vpack.c.b16 %v1488, %v1485
    %v2086 = vpack.c.b16 %v1489, %v1486
    %v2087 = vpack.c.b16 %v1493, %v1490
    %v2088 = vpack.c.b16 %v1494, %v1491
    %v2089 = vpack.c.b16 %v1495, %v1492
    %v2090 = vpack.c.b16 %v1499, %v1496
    %v2091 = vpack.c.b16 %v1500, %v1497
    %v2092 = vpack.c.b16 %v1501, %v1498
    %v2093 = vpack.c.b16 %v1505, %v1502
    %v2094 = vpack.c.b16 %v1506, %v1503
    %v2095 = vpack.c.b16 %v1507, %v1504
    %v2096 = vpack.c.b16 %v1511, %v1508
    %v2097 = vpack.c.b16 %v1512, %v1509
    %v2098 = vpack.c.b16 %v1513, %v1510
    %v2099 = vpack.c.b16 %v1517, %v1514
    %v2100 = vpack.c.b16 %v1518, %v1515
    %v2101 = vpack.c.b16 %v1519, %v1516
    %v2102 = vpack.c.b16 %v1523, %v1520
    %v2103 = vpack.c.b16 %v1524, %v1521
    %v2104 = vpack.c.b16 %v1525, %v1522
    %v2105 = vpack.c.b16 %v1529, %v1526
    %v2106 = vpack.c.b16 %v1530, %v1527
    %v2107 = vpack.c.b16 %v1531, %v1528
    %v2108 = vpack.c.b16 %v1535, %v1532
    %v2109 = vpack.c.b16 %v1536, %v1533
    %v2110 = vpack.c.b16 %v1537, %v1534
    %v2111 = vpack.c.b16 %v1541, %v1538
    %v2112 = vpack.c.b16 %v1542, %v1539
    %v2113 = vpack.c.b16 %v1543, %v1540
    %v2114 = vpack.c.b16 %v1547, %v1544
    %v2115 = vpack.c.b16 %v1548, %v1545
    %v2116 = vpack.c.b16 %v1549, %v1546
    %v2117 = vpack.c.b16 %v1553, %v1550
    %v2118 = vpack.c.b16 %v1554, %v1551
    %v2119 = vpack.c.b16 %v1555, %v1552
    %v2120 = vpack.c.b16 %v1559, %v1556
    %v2121 = vpack.c.b16 %v1560, %v1557
    %v2122 = vpack.c.b16 %v1561, %v1558
    %v2123 = vpack.c.b16 %v1565, %v1562
    %v2124 = vpack.c.b16 %v1566, %v1563
    %v2125 = vpack.c.b16 %v1567, %v1564
    %v2126 = vpack.c.b16 %v1571, %v1568
    %v2127 = vpack.c.b16 %v1572, %v1569
    %v2128 = vpack.c.b16 %v1573, %v1570
    %v2129 = vpack.c.b16 %v1577, %v1574
    %v2130 = vpack.c.b16 %v1578, %v1575
    %v2131 = vpack.c.b16 %v1579, %v1576
    %v2132 = vpack.c.b16 %v1583, %v1580
    %v2133 = vpack.c.b16 %v1584, %v1581
    %v2134 = vpack.c.b16 %v1585, %v1582
    %v2135 = vpack.c.b16 %v1589, %v1586
    %v2136 = vpack.c.b16 %v1590, %v1587
    %v2137 = vpack.c.b16 %v1591, %v1588
    %v2138 = vpack.c.b16 %v1595, %v1592
    %v2139 = vpack.c.b16 %v1596, %v1593
    %v2140 = vpack.c.b16 %v1597, %v1594
    %v2141 = vpack.c.b16 %v1601, %v1598
    %v2142 = vpack.c.b16 %v1602, %v1599
    %v2143 = vpack.c.b16 %v1603, %v1600
    %v2144 = vpack.c.b16 %v1607, %v1604
    %v2145 = vpack.c.b16 %v1608, %v1605
    %v2146 = vpack.c.b16 %v1609, %v1606
    %v2147 = vpack.c.b16 %v1613, %v1610
    %v2148 = vpack.c.b16 %v1614, %v1611
    %v2149 = vpack.c.b16 %v1615, %v1612
    %v2150 = vpack.c.b16 %v1619, %v1616
    %v2151 = vpack.c.b16 %v1620, %v1617
    %v2152 = vpack.c.b16 %v1621, %v1618
    %v2153 = vpack.c.b16 %v1625, %v1622
    %v2154 = vpack.c.b16 %v1626, %v1623
    %v2155 = vpack.c.b16 %v1627, %v1624
    %v2156 = vpack.c.b16 %v1631, %v1628
    %v2157 = vpack.c.b16 %v1632, %v1629
    %v2158 = vpack.c.b16 %v1633, %v1630
    %v2159 = vpack.c.b16 %v1637, %v1634
    %v2160 = vpack.c.b16 %v1638, %v1635
    %v2161 = vpack.c.b16 %v1639, %v1636
    %v2162 = vpack.c.b16 %v1643, %v1640
    %v2163 = vpack.c.b16 %v1644, %v1641
    %v2164 = vpack.c.b16 %v1645, %v1642
    %v2165 = vpack.c.b16 %v1649, %v1646
    %v2166 = vpack.c.b16 %v1650, %v1647
    %v2167 = vpack.c.b16 %v1651, %v1648
    %v2168 = vpack.c.b16 %v1655, %v1652
    %v2169 = vpack.c.b16 %v1656, %v1653
    %v2170 = vpack.c.b16 %v1657, %v1654
    %v2171 = vpack.c.b16 %v1661, %v1658
    %v2172 = vpack.c.b16 %v1662, %v1659
    %v2173 = vpack.c.b16 %v1663, %v1660
    %v2174 = vpack.c.b16 %v1667, %v1664
    %v2175 = vpack.c.b16 %v1668, %v1665
    %v2176 = vpack.c.b16 %v1669, %v1666
    %v2177 = vpack.c.b16 %v1673, %v1670
    %v2178 = vpack.c.b16 %v1674, %v1671
    %v2179 = vpack.c.b16 %v1675, %v1672
    %v2180 = vpack.c.b16 %v1679, %v1676
    %v2181 = vpack.c.b16 %v1680, %v1677
    %v2182 = vpack.c.b16 %v1681, %v1678
    %v2183 = vpack.c.b16 %v1685, %v1682
    %v2184 = vpack.c.b16 %v1686, %v1683
    %v2185 = vpack.c.b16 %v1687, %v1684
    %v2186 = vpack.c.b16 %v1691, %v1688
    %v2187 = vpack.c.b16 %v1692, %v1689
    %v2188 = vpack.c.b16 %v1693, %v1690
    %v2189 = vpack.c.b16 %v1697, %v1694
    %v2190 = vpack.c.b16 %v1698, %v1695
    %v2191 = vpack.c.b16 %v1699, %v1696
    %v2192 = vpack.c.b16 %v1703, %v1700
    %v2193 = vpack.c.b16 %v1704, %v1701
    %v2194 = vpack.c.b16 %v1705, %v1702
    %v2195 = vpack.c.b16 %v1709, %v1706
    %v2196 = vpack.c.b16 %v1710, %v1707
    %v2197 = vpack.c.b16 %v1711, %v1708
    %v2198 = vpack.c.b16 %v1715, %v1712
    %v2199 = vpack.c.b16 %v1716, %v1713
    %v2200 = vpack.c.b16 %v1717, %v1714
    %v2201 = vpack.c.b16 %v1721, %v1718
    %v2202 = vpack.c.b16 %v1722, %v1719
    %v2203 = vpack.c.b16 %v1723, %v1720
    %v2204 = vpack.c.b16 %v1727, %v1724
    %v2205 = vpack.c.b16 %v1728, %v1725
    %v2206 = vpack.c.b16 %v1729, %v1726
    %v2207 = vpack.c.b16 %v1733, %v1730
    %v2208 = vpack.c.b16 %v1734, %v1731
    %v2209 = vpack.c.b16 %v1735, %v1732
    %v2210 = vpack.c.b16 %v1739, %v1736
    %v2211 = vpack.c.b16 %v1740, %v1737
    %v2212 = vpack.c.b16 %v1741, %v1738
    %v2213 = vpack.c.b16 %v1745, %v1742
    %v2214 = vpack.c.b16 %v1746, %v1743
    %v2215 = vpack.c.b16 %v1747, %v1744
    %v2216 = vpack.c.b16 %v1751, %v1748
    %v2217 = vpack.c.b16 %v1752, %v1749
    %v2218 = vpack.c.b16 %v1753, %v1750
    %v2219 = vpack.c.b16 %v1757, %v1754
    %v2220 = vpack.c.b16 %v1758, %v1755
    %v2221 = vpack.c.b16 %v1759, %v1756
    %v2222 = vpack.c.b16 %v1763, %v1760
    %v2223 = vpack.c.b16 %v1764, %v1761
    %v2224 = vpack.c.b16 %v1765, %v1762
    %v2225 = vpack.c.b16 %v1769, %v1766
    %v2226 = vpack.c.b16 %v1770, %v1767
    %v2227 = vpack.c.b16 %v1771, %v1768
    %v2228 = vpack.c.b16 %v1775, %v1772
    %v2229 = vpack.c.b16 %v1776, %v1773
    %v2230 = vpack.c.b16 %v1777, %v1774
    %v2231 = vpack.c.b16 %v1781, %v1778
    %v2232 = vpack.c.b16 %v1782, %v1779
    %v2233 = vpack.c.b16 %v1783, %v1780
    %v2234 = vpack.c.b16 %v1787, %v1784
    %v2235 = vpack.c.b16 %v1788, %v1785
    %v2236 = vpack.c.b16 %v1789, %v1786
    %v2237 = vpack.c.b16 %v1793, %v1790
    %v2238 = vpack.c.b16 %v1794, %v1791
    %v2239 = vpack.c.b16 %v1795, %v1792
    %v2240 = vpack.c.b16 %v1799, %v1796
    %v2241 = vpack.c.b16 %v1800, %v1797
    %v2242 = vpack.c.b16 %v1801, %v1798
    %v2243 = vpack.c.b16 %v1805, %v1802
    %v2244 = vpack.c.b16 %v1806, %v1803
    %v2245 = vpack.c.b16 %v1807, %v1804
    %v2246 = vpack.c.b16 %v1811, %v1808
    %v2247 = vpack.c.b16 %v1812, %v1809
    %v2248 = vpack.c.b16 %v1813, %v1810
    %v2249 = vpack.c.b16 %v1817, %v1814
    %v2250 = vpack.c.b16 %v1818, %v1815
    %v2251 = vpack.c.b16 %v1819, %v1816
    %v2252 = vpack.c.b16 %v1823, %v1820
    %v2253 = vpack.c.b16 %v1824, %v1821
    %v2254 = vpack.c.b16 %v1825, %v1822
    %v2255 = vpack.c.b16 %v1829, %v1826
    %v2256 = vpack.c.b16 %v1830, %v1827
    %v2257 = vpack.c.b16 %v1831, %v1828
    %v2258 = vpack.c.b16 %v1835, %v1832
    %v2259 = vpack.c.b16 %v1836, %v1833
    %v2260 = vpack.c.b16 %v1837, %v1834
    %v2261 = vpack.c.b16 %v1841, %v1838
    %v2262 = vpack.c.b16 %v1842, %v1839
    %v2263 = vpack.c.b16 %v1843, %v1840
    %v2264 = vpack.c.b16 %v1847, %v1844
    %v2265 = vpack.c.b16 %v1848, %v1845
    %v2266 = vpack.c.b16 %v1849, %v1846
    %v2267 = vpack.c.b16 %v1853, %v1850
    %v2268 = vpack.c.b16 %v1854, %v1851
    %v2269 = vpack.c.b16 %v1855, %v1852
    %v2270 = vpack.c.b16 %v1859, %v1856
    %v2271 = vpack.c.b16 %v1860, %v1857
    %v2272 = vpack.c.b16 %v1861, %v1858
    %v2273 = vpack.c.b16 %v1865, %v1862
    %v2274 = vpack.c.b16 %v1866, %v1863
    %v2275 = vpack.c.b16 %v1867, %v1864
    %v2276 = vpack.c.b16 %v1871, %v1868
    %v2277 = vpack.c.b16 %v1872, %v1869
    %v2278 = vpack.c.b16 %v1873, %v1870
    %v2279 = vpack.c.b16 %v1877, %v1874
    %v2280 = vpack.c.b16 %v1878, %v1875
    %v2281 = vpack.c.b16 %v1879, %v1876
    %v2282 = vpack.c.b16 %v1883, %v1880
    %v2283 = vpack.c.b16 %v1884, %v1881
    %v2284 = vpack.c.b16 %v1885, %v1882
    %v2285 = vpack.c.b16 %v1889, %v1886
    %v2286 = vpack.c.b16 %v1890, %v1887
    %v2287 = vpack.c.b16 %v1891, %v1888
    %v2288 = vpack.c.b16 %v1895, %v1892
    %v2289 = vpack.c.b16 %v1896, %v1893
    %v2290 = vpack.c.b16 %v1897, %v1894
    %v2291 = vpack.c.b16 %v1901, %v1898
    %v2292 = vpack.c.b16 %v1902, %v1899
    %v2293 = vpack.c.b16 %v1903, %v1900
    %v2294 = vpack.c.b16 %v1907, %v1904
    %v2295 = vpack.c.b16 %v1908, %v1905
    %v2296 = vpack.c.b16 %v1909, %v1906
    %v2297 = vpack.c.b16 %v1913, %v1910
    %v2298 = vpack.c.b16 %v1914, %v1911
    %v2299 = vpack.c.b16 %v1915, %v1912
    %2684 = vmatprep.subr.bf16.mxu0 %v1938
    %2685 = vmatpush1.bf16.msra.mxu0 %v1937
    %2686 = vmatprep.subr.bf16.mxu0 %v1935
    %2687 = vmatpush1.bf16.msra.mxu0 %v1934
    %2688 = vmatprep.subr.bf16.mxu0 %v1932
    %2689 = vmatpush1.bf16.msra.mxu0 %v1931
    %2690 = vmatprep.subr.bf16.mxu0 %v1929
    %2691 = vmatpush1.bf16.msra.mxu0 %v1928
    %2692 = vmatprep.subr.bf16.mxu0 %v1926
    %2693 = vmatpush1.bf16.msra.mxu0 %v1925
    %2694 = vmatprep.subr.bf16.mxu0 %v1923
    %2695 = vmatpush1.bf16.msra.mxu0 %v1922
    %2696 = vmatprep.subr.bf16.mxu0 %v1920
    %2697 = vmatpush1.bf16.msra.mxu0 %v1919
    %2698 = vmatprep.subr.bf16.mxu0 %v1917
    %2699 = vmatpush1.bf16.msra.mxu0 %v1916
    %2700 = vmatprep.subr.bf16.mxu0 %v1962
    %2701 = vmatpush2.bf16.msra.mxu0 %v1961
    %2702 = vmatprep.subr.bf16.mxu0 %v1959
    %2703 = vmatpush2.bf16.msra.mxu0 %v1958
    %2704 = vmatprep.subr.bf16.mxu0 %v1956
    %2705 = vmatpush2.bf16.msra.mxu0 %v1955
    %2706 = vmatprep.subr.bf16.mxu0 %v1953
    %2707 = vmatpush2.bf16.msra.mxu0 %v1952
    %2708 = vmatprep.subr.bf16.mxu0 %v1950
    %2709 = vmatpush2.bf16.msra.mxu0 %v1949
    %2710 = vmatprep.subr.bf16.mxu0 %v1947
    %2711 = vmatpush2.bf16.msra.mxu0 %v1946
    %2712 = vmatprep.subr.bf16.mxu0 %v1944
    %2713 = vmatpush2.bf16.msra.mxu0 %v1943
    %2714 = vmatprep.subr.bf16.mxu0 %v1941
    %2715 = vmatpush2.bf16.msra.mxu0 %v1940
    %2716 = vmatprep.mubr.bf16.mxu0 %v92
    %2717 = vmatmul.mubr.bf16.gmra.mxu0 %v91
    %v2718 = vpop.f32.mrf.mxu0
    %v2719 = vadd.f32 %v624, %v2718
    %v2720 = vpop.f32.mrf.mxu0
    %v2721 = vadd.f32 %v628, %v2720
    %v2722 = vpop.f32.mrf.mxu0
    %v2723 = vadd.f32 %v624, %v2722
    %v2724 = vpop.f32.mrf.mxu0
    %v2725 = vadd.f32 %v628, %v2724
    %2726 = vdwg.mxu0
    %2727 = vmatprep.subr.bf16.mxu0 %v1986
    %2728 = vmatpush1.bf16.msra.mxu0 %v1985
    %2729 = vmatprep.subr.bf16.mxu0 %v1983
    %2730 = vmatpush1.bf16.msra.mxu0 %v1982
    %2731 = vmatprep.subr.bf16.mxu0 %v1980
    %2732 = vmatpush1.bf16.msra.mxu0 %v1979
    %2733 = vmatprep.subr.bf16.mxu0 %v1977
    %2734 = vmatpush1.bf16.msra.mxu0 %v1976
    %2735 = vmatprep.subr.bf16.mxu0 %v1974
    %2736 = vmatpush1.bf16.msra.mxu0 %v1973
    %2737 = vmatprep.subr.bf16.mxu0 %v1971
    %2738 = vmatpush1.bf16.msra.mxu0 %v1970
    %2739 = vmatprep.subr.bf16.mxu0 %v1968
    %2740 = vmatpush1.bf16.msra.mxu0 %v1967
    %2741 = vmatprep.subr.bf16.mxu0 %v1965
    %2742 = vmatpush1.bf16.msra.mxu0 %v1964
    %2743 = vmatprep.subr.bf16.mxu0 %v2010
    %2744 = vmatpush2.bf16.msra.mxu0 %v2009
    %2745 = vmatprep.subr.bf16.mxu0 %v2007
    %2746 = vmatpush2.bf16.msra.mxu0 %v2006
    %2747 = vmatprep.subr.bf16.mxu0 %v2004
    %2748 = vmatpush2.bf16.msra.mxu0 %v2003
    %2749 = vmatprep.subr.bf16.mxu0 %v2001
    %2750 = vmatpush2.bf16.msra.mxu0 %v2000
    %2751 = vmatprep.subr.bf16.mxu0 %v1998
    %2752 = vmatpush2.bf16.msra.mxu0 %v1997
    %2753 = vmatprep.subr.bf16.mxu0 %v1995
    %2754 = vmatpush2.bf16.msra.mxu0 %v1994
    %2755 = vmatprep.subr.bf16.mxu0 %v1992
    %2756 = vmatpush2.bf16.msra.mxu0 %v1991
    %2757 = vmatprep.subr.bf16.mxu0 %v1989
    %2758 = vmatpush2.bf16.msra.mxu0 %v1988
    %2759 = vmatprep.mubr.bf16.mxu0 %v94
    %2760 = vmatmul.mubr.bf16.gmra.mxu0 %v93
    %v2761 = vpop.f32.mrf.mxu0
    %v2762 = vadd.f32 %v2719, %v2761
    %v2763 = vpop.f32.mrf.mxu0
    %v2764 = vadd.f32 %v2721, %v2763
    %v2765 = vpop.f32.mrf.mxu0
    %v2766 = vadd.f32 %v2723, %v2765
    %v2767 = vpop.f32.mrf.mxu0
    %v2768 = vadd.f32 %v2725, %v2767
    %2769 = vdwg.mxu0
    %2770 = vmatprep.subr.bf16.mxu0 %v2034
    %2771 = vmatpush1.bf16.msra.mxu0 %v2033
    %2772 = vmatprep.subr.bf16.mxu0 %v2031
    %2773 = vmatpush1.bf16.msra.mxu0 %v2030
    %2774 = vmatprep.subr.bf16.mxu0 %v2028
    %2775 = vmatpush1.bf16.msra.mxu0 %v2027
    %2776 = vmatprep.subr.bf16.mxu0 %v2025
    %2777 = vmatpush1.bf16.msra.mxu0 %v2024
    %2778 = vmatprep.subr.bf16.mxu0 %v2022
    %2779 = vmatpush1.bf16.msra.mxu0 %v2021
    %2780 = vmatprep.subr.bf16.mxu0 %v2019
    %2781 = vmatpush1.bf16.msra.mxu0 %v2018
    %2782 = vmatprep.subr.bf16.mxu0 %v2016
    %2783 = vmatpush1.bf16.msra.mxu0 %v2015
    %2784 = vmatprep.subr.bf16.mxu0 %v2013
    %2785 = vmatpush1.bf16.msra.mxu0 %v2012
    %2786 = vmatprep.subr.bf16.mxu0 %v2058
    %2787 = vmatpush2.bf16.msra.mxu0 %v2057
    %2788 = vmatprep.subr.bf16.mxu0 %v2055
    %2789 = vmatpush2.bf16.msra.mxu0 %v2054
    %2790 = vmatprep.subr.bf16.mxu0 %v2052
    %2791 = vmatpush2.bf16.msra.mxu0 %v2051
    %2792 = vmatprep.subr.bf16.mxu0 %v2049
    %2793 = vmatpush2.bf16.msra.mxu0 %v2048
    %2794 = vmatprep.subr.bf16.mxu0 %v2046
    %2795 = vmatpush2.bf16.msra.mxu0 %v2045
    %2796 = vmatprep.subr.bf16.mxu0 %v2043
    %2797 = vmatpush2.bf16.msra.mxu0 %v2042
    %2798 = vmatprep.subr.bf16.mxu0 %v2040
    %2799 = vmatpush2.bf16.msra.mxu0 %v2039
    %2800 = vmatprep.subr.bf16.mxu0 %v2037
    %2801 = vmatpush2.bf16.msra.mxu0 %v2036
    %2802 = vmatprep.mubr.bf16.mxu0 %v96
    %2803 = vmatmul.mubr.bf16.gmra.mxu0 %v95
    %v2804 = vpop.f32.mrf.mxu0
    %v2805 = vadd.f32 %v2762, %v2804
    %v2806 = vpop.f32.mrf.mxu0
    %v2807 = vadd.f32 %v2764, %v2806
    %v2808 = vpop.f32.mrf.mxu0
    %v2809 = vadd.f32 %v2766, %v2808
    %v2810 = vpop.f32.mrf.mxu0
    %v2811 = vadd.f32 %v2768, %v2810
    %2812 = vdwg.mxu0
    %2813 = vmatprep.subr.bf16.mxu0 %v2082
    %2814 = vmatpush1.bf16.msra.mxu0 %v2081
    %2815 = vmatprep.subr.bf16.mxu0 %v2079
    %2816 = vmatpush1.bf16.msra.mxu0 %v2078
    %2817 = vmatprep.subr.bf16.mxu0 %v2076
    %2818 = vmatpush1.bf16.msra.mxu0 %v2075
    %2819 = vmatprep.subr.bf16.mxu0 %v2073
    %2820 = vmatpush1.bf16.msra.mxu0 %v2072
    %2821 = vmatprep.subr.bf16.mxu0 %v2070
    %2822 = vmatpush1.bf16.msra.mxu0 %v2069
    %2823 = vmatprep.subr.bf16.mxu0 %v2067
    %2824 = vmatpush1.bf16.msra.mxu0 %v2066
    %2825 = vmatprep.subr.bf16.mxu0 %v2064
    %2826 = vmatpush1.bf16.msra.mxu0 %v2063
    %2827 = vmatprep.subr.bf16.mxu0 %v2061
    %2828 = vmatpush1.bf16.msra.mxu0 %v2060
    %2829 = vmatprep.subr.bf16.mxu0 %v2106
    %2830 = vmatpush2.bf16.msra.mxu0 %v2105
    %2831 = vmatprep.subr.bf16.mxu0 %v2103
    %2832 = vmatpush2.bf16.msra.mxu0 %v2102
    %2833 = vmatprep.subr.bf16.mxu0 %v2100
    %2834 = vmatpush2.bf16.msra.mxu0 %v2099
    %2835 = vmatprep.subr.bf16.mxu0 %v2097
    %2836 = vmatpush2.bf16.msra.mxu0 %v2096
    %2837 = vmatprep.subr.bf16.mxu0 %v2094
    %2838 = vmatpush2.bf16.msra.mxu0 %v2093
    %2839 = vmatprep.subr.bf16.mxu0 %v2091
    %2840 = vmatpush2.bf16.msra.mxu0 %v2090
    %2841 = vmatprep.subr.bf16.mxu0 %v2088
    %2842 = vmatpush2.bf16.msra.mxu0 %v2087
    %2843 = vmatprep.subr.bf16.mxu0 %v2085
    %2844 = vmatpush2.bf16.msra.mxu0 %v2084
    %2845 = vmatprep.mubr.bf16.mxu0 %v98
    %2846 = vmatmul.mubr.bf16.gmra.mxu0 %v97
    %v2847 = vpop.f32.mrf.mxu0
    %v2848 = vadd.f32 %v2805, %v2847
    %v2849 = vpop.f32.mrf.mxu0
    %v2850 = vadd.f32 %v2807, %v2849
    %v2851 = vpop.f32.mrf.mxu0
    %v2852 = vadd.f32 %v2809, %v2851
    %v2853 = vpop.f32.mrf.mxu0
    %v2854 = vadd.f32 %v2811, %v2853
    %2855 = vdwg.mxu0
    %2856 = vmatprep.subr.bf16.mxu0 %v2130
    %2857 = vmatpush1.bf16.msra.mxu0 %v2129
    %2858 = vmatprep.subr.bf16.mxu0 %v2127
    %2859 = vmatpush1.bf16.msra.mxu0 %v2126
    %2860 = vmatprep.subr.bf16.mxu0 %v2124
    %2861 = vmatpush1.bf16.msra.mxu0 %v2123
    %2862 = vmatprep.subr.bf16.mxu0 %v2121
    %2863 = vmatpush1.bf16.msra.mxu0 %v2120
    %2864 = vmatprep.subr.bf16.mxu0 %v2118
    %2865 = vmatpush1.bf16.msra.mxu0 %v2117
    %2866 = vmatprep.subr.bf16.mxu0 %v2115
    %2867 = vmatpush1.bf16.msra.mxu0 %v2114
    %2868 = vmatprep.subr.bf16.mxu0 %v2112
    %2869 = vmatpush1.bf16.msra.mxu0 %v2111
    %2870 = vmatprep.subr.bf16.mxu0 %v2109
    %2871 = vmatpush1.bf16.msra.mxu0 %v2108
    %2872 = vmatprep.subr.bf16.mxu0 %v2154
    %2873 = vmatpush2.bf16.msra.mxu0 %v2153
    %2874 = vmatprep.subr.bf16.mxu0 %v2151
    %2875 = vmatpush2.bf16.msra.mxu0 %v2150
    %2876 = vmatprep.subr.bf16.mxu0 %v2148
    %2877 = vmatpush2.bf16.msra.mxu0 %v2147
    %2878 = vmatprep.subr.bf16.mxu0 %v2145
    %2879 = vmatpush2.bf16.msra.mxu0 %v2144
    %2880 = vmatprep.subr.bf16.mxu0 %v2142
    %2881 = vmatpush2.bf16.msra.mxu0 %v2141
    %2882 = vmatprep.subr.bf16.mxu0 %v2139
    %2883 = vmatpush2.bf16.msra.mxu0 %v2138
    %2884 = vmatprep.subr.bf16.mxu0 %v2136
    %2885 = vmatpush2.bf16.msra.mxu0 %v2135
    %2886 = vmatprep.subr.bf16.mxu0 %v2133
    %2887 = vmatpush2.bf16.msra.mxu0 %v2132
    %2888 = vmatprep.mubr.bf16.mxu0 %v100
    %2889 = vmatmul.mubr.bf16.gmra.mxu0 %v99
    %v2890 = vpop.f32.mrf.mxu0
    %v2891 = vadd.f32 %v2848, %v2890
    %v2892 = vpop.f32.mrf.mxu0
    %v2893 = vadd.f32 %v2850, %v2892
    %v2894 = vpop.f32.mrf.mxu0
    %v2895 = vadd.f32 %v2852, %v2894
    %v2896 = vpop.f32.mrf.mxu0
    %v2897 = vadd.f32 %v2854, %v2896
    %2898 = vdwg.mxu0
    %2899 = vmatprep.subr.bf16.mxu0 %v2178
    %2900 = vmatpush1.bf16.msra.mxu0 %v2177
    %2901 = vmatprep.subr.bf16.mxu0 %v2175
    %2902 = vmatpush1.bf16.msra.mxu0 %v2174
    %2903 = vmatprep.subr.bf16.mxu0 %v2172
    %2904 = vmatpush1.bf16.msra.mxu0 %v2171
    %2905 = vmatprep.subr.bf16.mxu0 %v2169
    %2906 = vmatpush1.bf16.msra.mxu0 %v2168
    %2907 = vmatprep.subr.bf16.mxu0 %v2166
    %2908 = vmatpush1.bf16.msra.mxu0 %v2165
    %2909 = vmatprep.subr.bf16.mxu0 %v2163
    %2910 = vmatpush1.bf16.msra.mxu0 %v2162
    %2911 = vmatprep.subr.bf16.mxu0 %v2160
    %2912 = vmatpush1.bf16.msra.mxu0 %v2159
    %2913 = vmatprep.subr.bf16.mxu0 %v2157
    %2914 = vmatpush1.bf16.msra.mxu0 %v2156
    %2915 = vmatprep.subr.bf16.mxu0 %v2202
    %2916 = vmatpush2.bf16.msra.mxu0 %v2201
    %2917 = vmatprep.subr.bf16.mxu0 %v2199
    %2918 = vmatpush2.bf16.msra.mxu0 %v2198
    %2919 = vmatprep.subr.bf16.mxu0 %v2196
    %2920 = vmatpush2.bf16.msra.mxu0 %v2195
    %2921 = vmatprep.subr.bf16.mxu0 %v2193
    %2922 = vmatpush2.bf16.msra.mxu0 %v2192
    %2923 = vmatprep.subr.bf16.mxu0 %v2190
    %2924 = vmatpush2.bf16.msra.mxu0 %v2189
    %2925 = vmatprep.subr.bf16.mxu0 %v2187
    %2926 = vmatpush2.bf16.msra.mxu0 %v2186
    %2927 = vmatprep.subr.bf16.mxu0 %v2184
    %2928 = vmatpush2.bf16.msra.mxu0 %v2183
    %2929 = vmatprep.subr.bf16.mxu0 %v2181
    %2930 = vmatpush2.bf16.msra.mxu0 %v2180
    %2931 = vmatprep.mubr.bf16.mxu0 %v102
    %2932 = vmatmul.mubr.bf16.gmra.mxu0 %v101
    %v2933 = vpop.f32.mrf.mxu0
    %v2934 = vadd.f32 %v2891, %v2933
    %v2935 = vpop.f32.mrf.mxu0
    %v2936 = vadd.f32 %v2893, %v2935
    %v2937 = vpop.f32.mrf.mxu0
    %v2938 = vadd.f32 %v2895, %v2937
    %v2939 = vpop.f32.mrf.mxu0
    %v2940 = vadd.f32 %v2897, %v2939
    %2941 = vdwg.mxu0
    %2942 = vmatprep.subr.bf16.mxu0 %v2226
    %2943 = vmatpush1.bf16.msra.mxu0 %v2225
    %2944 = vmatprep.subr.bf16.mxu0 %v2223
    %2945 = vmatpush1.bf16.msra.mxu0 %v2222
    %2946 = vmatprep.subr.bf16.mxu0 %v2220
    %2947 = vmatpush1.bf16.msra.mxu0 %v2219
    %2948 = vmatprep.subr.bf16.mxu0 %v2217
    %2949 = vmatpush1.bf16.msra.mxu0 %v2216
    %2950 = vmatprep.subr.bf16.mxu0 %v2214
    %2951 = vmatpush1.bf16.msra.mxu0 %v2213
    %2952 = vmatprep.subr.bf16.mxu0 %v2211
    %2953 = vmatpush1.bf16.msra.mxu0 %v2210
    %2954 = vmatprep.subr.bf16.mxu0 %v2208
    %2955 = vmatpush1.bf16.msra.mxu0 %v2207
    %2956 = vmatprep.subr.bf16.mxu0 %v2205
    %2957 = vmatpush1.bf16.msra.mxu0 %v2204
    %2958 = vmatprep.subr.bf16.mxu0 %v2250
    %2959 = vmatpush2.bf16.msra.mxu0 %v2249
    %2960 = vmatprep.subr.bf16.mxu0 %v2247
    %2961 = vmatpush2.bf16.msra.mxu0 %v2246
    %2962 = vmatprep.subr.bf16.mxu0 %v2244
    %2963 = vmatpush2.bf16.msra.mxu0 %v2243
    %2964 = vmatprep.subr.bf16.mxu0 %v2241
    %2965 = vmatpush2.bf16.msra.mxu0 %v2240
    %2966 = vmatprep.subr.bf16.mxu0 %v2238
    %2967 = vmatpush2.bf16.msra.mxu0 %v2237
    %2968 = vmatprep.subr.bf16.mxu0 %v2235
    %2969 = vmatpush2.bf16.msra.mxu0 %v2234
    %2970 = vmatprep.subr.bf16.mxu0 %v2232
    %2971 = vmatpush2.bf16.msra.mxu0 %v2231
    %2972 = vmatprep.subr.bf16.mxu0 %v2229
    %2973 = vmatpush2.bf16.msra.mxu0 %v2228
    %2974 = vmatprep.mubr.bf16.mxu0 %v104
    %2975 = vmatmul.mubr.bf16.gmra.mxu0 %v103
    %v2976 = vpop.f32.mrf.mxu0
    %v2977 = vadd.f32 %v2934, %v2976
    %v2978 = vpop.f32.mrf.mxu0
    %v2979 = vadd.f32 %v2936, %v2978
    %v2980 = vpop.f32.mrf.mxu0
    %v2981 = vadd.f32 %v2938, %v2980
    %v2982 = vpop.f32.mrf.mxu0
    %v2983 = vadd.f32 %v2940, %v2982
    %2984 = vdwg.mxu0
    %2985 = vmatprep.subr.bf16.mxu0 %v2274
    %2986 = vmatpush1.bf16.msra.mxu0 %v2273
    %2987 = vmatprep.subr.bf16.mxu0 %v2271
    %2988 = vmatpush1.bf16.msra.mxu0 %v2270
    %2989 = vmatprep.subr.bf16.mxu0 %v2268
    %2990 = vmatpush1.bf16.msra.mxu0 %v2267
    %2991 = vmatprep.subr.bf16.mxu0 %v2265
    %2992 = vmatpush1.bf16.msra.mxu0 %v2264
    %2993 = vmatprep.subr.bf16.mxu0 %v2262
    %2994 = vmatpush1.bf16.msra.mxu0 %v2261
    %2995 = vmatprep.subr.bf16.mxu0 %v2259
    %2996 = vmatpush1.bf16.msra.mxu0 %v2258
    %2997 = vmatprep.subr.bf16.mxu0 %v2256
    %2998 = vmatpush1.bf16.msra.mxu0 %v2255
    %2999 = vmatprep.subr.bf16.mxu0 %v2253
    %3000 = vmatpush1.bf16.msra.mxu0 %v2252
    %3001 = vmatprep.subr.bf16.mxu0 %v2298
    %3002 = vmatpush2.bf16.msra.mxu0 %v2297
    %3003 = vmatprep.subr.bf16.mxu0 %v2295
    %3004 = vmatpush2.bf16.msra.mxu0 %v2294
    %3005 = vmatprep.subr.bf16.mxu0 %v2292
    %3006 = vmatpush2.bf16.msra.mxu0 %v2291
    %3007 = vmatprep.subr.bf16.mxu0 %v2289
    %3008 = vmatpush2.bf16.msra.mxu0 %v2288
    %3009 = vmatprep.subr.bf16.mxu0 %v2286
    %3010 = vmatpush2.bf16.msra.mxu0 %v2285
    %3011 = vmatprep.subr.bf16.mxu0 %v2283
    %3012 = vmatpush2.bf16.msra.mxu0 %v2282
    %3013 = vmatprep.subr.bf16.mxu0 %v2280
    %3014 = vmatpush2.bf16.msra.mxu0 %v2279
    %3015 = vmatprep.subr.bf16.mxu0 %v2277
    %3016 = vmatpush2.bf16.msra.mxu0 %v2276
    %3017 = vmatprep.mubr.bf16.mxu0 %v106
    %3018 = vmatmul.mubr.bf16.gmra.mxu0 %v105
    %v3019 = vpop.f32.mrf.mxu0
    %v3020 = vadd.f32 %v2977, %v3019
    %v3021 = vpop.f32.mrf.mxu0
    %v3022 = vadd.f32 %v2979, %v3021
    %v3023 = vpop.f32.mrf.mxu0
    %v3024 = vadd.f32 %v2981, %v3023
    %v3025 = vpop.f32.mrf.mxu0
    %v3026 = vadd.f32 %v2983, %v3025
    %3027 = vdwg.mxu0
    %3028 = vmatprep.subr.bf16.mxu0 0
    %3029 = vmatpush1.bf16.msra.mxu0 %v1939
    %3030 = vmatprep.subr.bf16.mxu0 0
    %3031 = vmatpush1.bf16.msra.mxu0 %v1936
    %3032 = vmatprep.subr.bf16.mxu0 0
    %3033 = vmatpush1.bf16.msra.mxu0 %v1933
    %3034 = vmatprep.subr.bf16.mxu0 0
    %3035 = vmatpush1.bf16.msra.mxu0 %v1930
    %3036 = vmatprep.subr.bf16.mxu0 0
    %3037 = vmatpush1.bf16.msra.mxu0 %v1927
    %3038 = vmatprep.subr.bf16.mxu0 0
    %3039 = vmatpush1.bf16.msra.mxu0 %v1924
    %3040 = vmatprep.subr.bf16.mxu0 0
    %3041 = vmatpush1.bf16.msra.mxu0 %v1921
    %3042 = vmatprep.subr.bf16.mxu0 0
    %3043 = vmatpush1.bf16.msra.mxu0 %v1918
    %3044 = vmatprep.subr.bf16.mxu0 0
    %3045 = vmatpush2.bf16.msra.mxu0 %v1963
    %3046 = vmatprep.subr.bf16.mxu0 0
    %3047 = vmatpush2.bf16.msra.mxu0 %v1960
    %3048 = vmatprep.subr.bf16.mxu0 0
    %3049 = vmatpush2.bf16.msra.mxu0 %v1957
    %3050 = vmatprep.subr.bf16.mxu0 0
    %3051 = vmatpush2.bf16.msra.mxu0 %v1954
    %3052 = vmatprep.subr.bf16.mxu0 0
    %3053 = vmatpush2.bf16.msra.mxu0 %v1951
    %3054 = vmatprep.subr.bf16.mxu0 0
    %3055 = vmatpush2.bf16.msra.mxu0 %v1948
    %3056 = vmatprep.subr.bf16.mxu0 0
    %3057 = vmatpush2.bf16.msra.mxu0 %v1945
    %3058 = vmatprep.subr.bf16.mxu0 0
    %3059 = vmatpush2.bf16.msra.mxu0 %v1942
    %3060 = vmatprep.mubr.bf16.mxu0 %v92
    %3061 = vmatmul.mubr.bf16.gmra.mxu0 %v91
    %v3062 = vpop.f32.mrf.mxu0
    %v3063 = vadd.f32 %v632, %v3062
    %v3064 = vpop.f32.mrf.mxu0
    %v3065 = vpop.f32.mrf.mxu0
    %v3066 = vadd.f32 %v632, %v3065
    %v3067 = vpop.f32.mrf.mxu0
    %3068 = vdwg.mxu0
    %3069 = vmatprep.subr.bf16.mxu0 0
    %3070 = vmatpush1.bf16.msra.mxu0 %v1987
    %3071 = vmatprep.subr.bf16.mxu0 0
    %3072 = vmatpush1.bf16.msra.mxu0 %v1984
    %3073 = vmatprep.subr.bf16.mxu0 0
    %3074 = vmatpush1.bf16.msra.mxu0 %v1981
    %3075 = vmatprep.subr.bf16.mxu0 0
    %3076 = vmatpush1.bf16.msra.mxu0 %v1978
    %3077 = vmatprep.subr.bf16.mxu0 0
    %3078 = vmatpush1.bf16.msra.mxu0 %v1975
    %3079 = vmatprep.subr.bf16.mxu0 0
    %3080 = vmatpush1.bf16.msra.mxu0 %v1972
    %3081 = vmatprep.subr.bf16.mxu0 0
    %3082 = vmatpush1.bf16.msra.mxu0 %v1969
    %3083 = vmatprep.subr.bf16.mxu0 0
    %3084 = vmatpush1.bf16.msra.mxu0 %v1966
    %3085 = vmatprep.subr.bf16.mxu0 0
    %3086 = vmatpush2.bf16.msra.mxu0 %v2011
    %3087 = vmatprep.subr.bf16.mxu0 0
    %3088 = vmatpush2.bf16.msra.mxu0 %v2008
    %3089 = vmatprep.subr.bf16.mxu0 0
    %3090 = vmatpush2.bf16.msra.mxu0 %v2005
    %3091 = vmatprep.subr.bf16.mxu0 0
    %3092 = vmatpush2.bf16.msra.mxu0 %v2002
    %3093 = vmatprep.subr.bf16.mxu0 0
    %3094 = vmatpush2.bf16.msra.mxu0 %v1999
    %3095 = vmatprep.subr.bf16.mxu0 0
    %3096 = vmatpush2.bf16.msra.mxu0 %v1996
    %3097 = vmatprep.subr.bf16.mxu0 0
    %3098 = vmatpush2.bf16.msra.mxu0 %v1993
    %3099 = vmatprep.subr.bf16.mxu0 0
    %3100 = vmatpush2.bf16.msra.mxu0 %v1990
    %3101 = vmatprep.mubr.bf16.mxu0 %v94
    %3102 = vmatmul.mubr.bf16.gmra.mxu0 %v93
    %v3103 = vpop.f32.mrf.mxu0
    %v3104 = vadd.f32 %v3063, %v3103
    %v3105 = vpop.f32.mrf.mxu0
    %v3106 = vpop.f32.mrf.mxu0
    %v3107 = vadd.f32 %v3066, %v3106
    %v3108 = vpop.f32.mrf.mxu0
    %3109 = vdwg.mxu0
    %3110 = vmatprep.subr.bf16.mxu0 0
    %3111 = vmatpush1.bf16.msra.mxu0 %v2035
    %3112 = vmatprep.subr.bf16.mxu0 0
    %3113 = vmatpush1.bf16.msra.mxu0 %v2032
    %3114 = vmatprep.subr.bf16.mxu0 0
    %3115 = vmatpush1.bf16.msra.mxu0 %v2029
    %3116 = vmatprep.subr.bf16.mxu0 0
    %3117 = vmatpush1.bf16.msra.mxu0 %v2026
    %3118 = vmatprep.subr.bf16.mxu0 0
    %3119 = vmatpush1.bf16.msra.mxu0 %v2023
    %3120 = vmatprep.subr.bf16.mxu0 0
    %3121 = vmatpush1.bf16.msra.mxu0 %v2020
    %3122 = vmatprep.subr.bf16.mxu0 0
    %3123 = vmatpush1.bf16.msra.mxu0 %v2017
    %3124 = vmatprep.subr.bf16.mxu0 0
    %3125 = vmatpush1.bf16.msra.mxu0 %v2014
    %3126 = vmatprep.subr.bf16.mxu0 0
    %3127 = vmatpush2.bf16.msra.mxu0 %v2059
    %3128 = vmatprep.subr.bf16.mxu0 0
    %3129 = vmatpush2.bf16.msra.mxu0 %v2056
    %3130 = vmatprep.subr.bf16.mxu0 0
    %3131 = vmatpush2.bf16.msra.mxu0 %v2053
    %3132 = vmatprep.subr.bf16.mxu0 0
    %3133 = vmatpush2.bf16.msra.mxu0 %v2050
    %3134 = vmatprep.subr.bf16.mxu0 0
    %3135 = vmatpush2.bf16.msra.mxu0 %v2047
    %3136 = vmatprep.subr.bf16.mxu0 0
    %3137 = vmatpush2.bf16.msra.mxu0 %v2044
    %3138 = vmatprep.subr.bf16.mxu0 0
    %3139 = vmatpush2.bf16.msra.mxu0 %v2041
    %3140 = vmatprep.subr.bf16.mxu0 0
    %3141 = vmatpush2.bf16.msra.mxu0 %v2038
    %3142 = vmatprep.mubr.bf16.mxu0 %v96
    %3143 = vmatmul.mubr.bf16.gmra.mxu0 %v95
    %v3144 = vpop.f32.mrf.mxu0
    %v3145 = vadd.f32 %v3104, %v3144
    %v3146 = vpop.f32.mrf.mxu0
    %v3147 = vpop.f32.mrf.mxu0
    %v3148 = vadd.f32 %v3107, %v3147
    %v3149 = vpop.f32.mrf.mxu0
    %3150 = vdwg.mxu0
    %3151 = vmatprep.subr.bf16.mxu0 0
    %3152 = vmatpush1.bf16.msra.mxu0 %v2083
    %3153 = vmatprep.subr.bf16.mxu0 0
    %3154 = vmatpush1.bf16.msra.mxu0 %v2080
    %3155 = vmatprep.subr.bf16.mxu0 0
    %3156 = vmatpush1.bf16.msra.mxu0 %v2077
    %3157 = vmatprep.subr.bf16.mxu0 0
    %3158 = vmatpush1.bf16.msra.mxu0 %v2074
    %3159 = vmatprep.subr.bf16.mxu0 0
    %3160 = vmatpush1.bf16.msra.mxu0 %v2071
    %3161 = vmatprep.subr.bf16.mxu0 0
    %3162 = vmatpush1.bf16.msra.mxu0 %v2068
    %3163 = vmatprep.subr.bf16.mxu0 0
    %3164 = vmatpush1.bf16.msra.mxu0 %v2065
    %3165 = vmatprep.subr.bf16.mxu0 0
    %3166 = vmatpush1.bf16.msra.mxu0 %v2062
    %3167 = vmatprep.subr.bf16.mxu0 0
    %3168 = vmatpush2.bf16.msra.mxu0 %v2107
    %3169 = vmatprep.subr.bf16.mxu0 0
    %3170 = vmatpush2.bf16.msra.mxu0 %v2104
    %3171 = vmatprep.subr.bf16.mxu0 0
    %3172 = vmatpush2.bf16.msra.mxu0 %v2101
    %3173 = vmatprep.subr.bf16.mxu0 0
    %3174 = vmatpush2.bf16.msra.mxu0 %v2098
    %3175 = vmatprep.subr.bf16.mxu0 0
    %3176 = vmatpush2.bf16.msra.mxu0 %v2095
    %3177 = vmatprep.subr.bf16.mxu0 0
    %3178 = vmatpush2.bf16.msra.mxu0 %v2092
    %3179 = vmatprep.subr.bf16.mxu0 0
    %3180 = vmatpush2.bf16.msra.mxu0 %v2089
    %3181 = vmatprep.subr.bf16.mxu0 0
    %3182 = vmatpush2.bf16.msra.mxu0 %v2086
    %3183 = vmatprep.mubr.bf16.mxu0 %v98
    %3184 = vmatmul.mubr.bf16.gmra.mxu0 %v97
    %v3185 = vpop.f32.mrf.mxu0
    %v3186 = vadd.f32 %v3145, %v3185
    %v3187 = vpop.f32.mrf.mxu0
    %v3188 = vpop.f32.mrf.mxu0
    %v3189 = vadd.f32 %v3148, %v3188
    %v3190 = vpop.f32.mrf.mxu0
    %3191 = vdwg.mxu0
    %3192 = vmatprep.subr.bf16.mxu0 0
    %3193 = vmatpush1.bf16.msra.mxu0 %v2131
    %3194 = vmatprep.subr.bf16.mxu0 0
    %3195 = vmatpush1.bf16.msra.mxu0 %v2128
    %3196 = vmatprep.subr.bf16.mxu0 0
    %3197 = vmatpush1.bf16.msra.mxu0 %v2125
    %3198 = vmatprep.subr.bf16.mxu0 0
    %3199 = vmatpush1.bf16.msra.mxu0 %v2122
    %3200 = vmatprep.subr.bf16.mxu0 0
    %3201 = vmatpush1.bf16.msra.mxu0 %v2119
    %3202 = vmatprep.subr.bf16.mxu0 0
    %3203 = vmatpush1.bf16.msra.mxu0 %v2116
    %3204 = vmatprep.subr.bf16.mxu0 0
    %3205 = vmatpush1.bf16.msra.mxu0 %v2113
    %3206 = vmatprep.subr.bf16.mxu0 0
    %3207 = vmatpush1.bf16.msra.mxu0 %v2110
    %3208 = vmatprep.subr.bf16.mxu0 0
    %3209 = vmatpush2.bf16.msra.mxu0 %v2155
    %3210 = vmatprep.subr.bf16.mxu0 0
    %3211 = vmatpush2.bf16.msra.mxu0 %v2152
    %3212 = vmatprep.subr.bf16.mxu0 0
    %3213 = vmatpush2.bf16.msra.mxu0 %v2149
    %3214 = vmatprep.subr.bf16.mxu0 0
    %3215 = vmatpush2.bf16.msra.mxu0 %v2146
    %3216 = vmatprep.subr.bf16.mxu0 0
    %3217 = vmatpush2.bf16.msra.mxu0 %v2143
    %3218 = vmatprep.subr.bf16.mxu0 0
    %3219 = vmatpush2.bf16.msra.mxu0 %v2140
    %3220 = vmatprep.subr.bf16.mxu0 0
    %3221 = vmatpush2.bf16.msra.mxu0 %v2137
    %3222 = vmatprep.subr.bf16.mxu0 0
    %3223 = vmatpush2.bf16.msra.mxu0 %v2134
    %3224 = vmatprep.mubr.bf16.mxu0 %v100
    %3225 = vmatmul.mubr.bf16.gmra.mxu0 %v99
    %v3226 = vpop.f32.mrf.mxu0
    %v3227 = vadd.f32 %v3186, %v3226
    %v3228 = vpop.f32.mrf.mxu0
    %v3229 = vpop.f32.mrf.mxu0
    %v3230 = vadd.f32 %v3189, %v3229
    %v3231 = vpop.f32.mrf.mxu0
    %3232 = vdwg.mxu0
    %3233 = vmatprep.subr.bf16.mxu0 0
    %3234 = vmatpush1.bf16.msra.mxu0 %v2179
    %3235 = vmatprep.subr.bf16.mxu0 0
    %3236 = vmatpush1.bf16.msra.mxu0 %v2176
    %3237 = vmatprep.subr.bf16.mxu0 0
    %3238 = vmatpush1.bf16.msra.mxu0 %v2173
    %3239 = vmatprep.subr.bf16.mxu0 0
    %3240 = vmatpush1.bf16.msra.mxu0 %v2170
    %3241 = vmatprep.subr.bf16.mxu0 0
    %3242 = vmatpush1.bf16.msra.mxu0 %v2167
    %3243 = vmatprep.subr.bf16.mxu0 0
    %3244 = vmatpush1.bf16.msra.mxu0 %v2164
    %3245 = vmatprep.subr.bf16.mxu0 0
    %3246 = vmatpush1.bf16.msra.mxu0 %v2161
    %3247 = vmatprep.subr.bf16.mxu0 0
    %3248 = vmatpush1.bf16.msra.mxu0 %v2158
    %3249 = vmatprep.subr.bf16.mxu0 0
    %3250 = vmatpush2.bf16.msra.mxu0 %v2203
    %3251 = vmatprep.subr.bf16.mxu0 0
    %3252 = vmatpush2.bf16.msra.mxu0 %v2200
    %3253 = vmatprep.subr.bf16.mxu0 0
    %3254 = vmatpush2.bf16.msra.mxu0 %v2197
    %3255 = vmatprep.subr.bf16.mxu0 0
    %3256 = vmatpush2.bf16.msra.mxu0 %v2194
    %3257 = vmatprep.subr.bf16.mxu0 0
    %3258 = vmatpush2.bf16.msra.mxu0 %v2191
    %3259 = vmatprep.subr.bf16.mxu0 0
    %3260 = vmatpush2.bf16.msra.mxu0 %v2188
    %3261 = vmatprep.subr.bf16.mxu0 0
    %3262 = vmatpush2.bf16.msra.mxu0 %v2185
    %3263 = vmatprep.subr.bf16.mxu0 0
    %3264 = vmatpush2.bf16.msra.mxu0 %v2182
    %3265 = vmatprep.mubr.bf16.mxu0 %v102
    %3266 = vmatmul.mubr.bf16.gmra.mxu0 %v101
    %v3267 = vpop.f32.mrf.mxu0
    %v3268 = vadd.f32 %v3227, %v3267
    %v3269 = vpop.f32.mrf.mxu0
    %v3270 = vpop.f32.mrf.mxu0
    %v3271 = vadd.f32 %v3230, %v3270
    %v3272 = vpop.f32.mrf.mxu0
    %3273 = vdwg.mxu0
    %3274 = vmatprep.subr.bf16.mxu0 0
    %3275 = vmatpush1.bf16.msra.mxu0 %v2227
    %3276 = vmatprep.subr.bf16.mxu0 0
    %3277 = vmatpush1.bf16.msra.mxu0 %v2224
    %3278 = vmatprep.subr.bf16.mxu0 0
    %3279 = vmatpush1.bf16.msra.mxu0 %v2221
    %3280 = vmatprep.subr.bf16.mxu0 0
    %3281 = vmatpush1.bf16.msra.mxu0 %v2218
    %3282 = vmatprep.subr.bf16.mxu0 0
    %3283 = vmatpush1.bf16.msra.mxu0 %v2215
    %3284 = vmatprep.subr.bf16.mxu0 0
    %3285 = vmatpush1.bf16.msra.mxu0 %v2212
    %3286 = vmatprep.subr.bf16.mxu0 0
    %3287 = vmatpush1.bf16.msra.mxu0 %v2209
    %3288 = vmatprep.subr.bf16.mxu0 0
    %3289 = vmatpush1.bf16.msra.mxu0 %v2206
    %3290 = vmatprep.subr.bf16.mxu0 0
    %3291 = vmatpush2.bf16.msra.mxu0 %v2251
    %3292 = vmatprep.subr.bf16.mxu0 0
    %3293 = vmatpush2.bf16.msra.mxu0 %v2248
    %3294 = vmatprep.subr.bf16.mxu0 0
    %3295 = vmatpush2.bf16.msra.mxu0 %v2245
    %3296 = vmatprep.subr.bf16.mxu0 0
    %3297 = vmatpush2.bf16.msra.mxu0 %v2242
    %3298 = vmatprep.subr.bf16.mxu0 0
    %3299 = vmatpush2.bf16.msra.mxu0 %v2239
    %3300 = vmatprep.subr.bf16.mxu0 0
    %3301 = vmatpush2.bf16.msra.mxu0 %v2236
    %3302 = vmatprep.subr.bf16.mxu0 0
    %3303 = vmatpush2.bf16.msra.mxu0 %v2233
    %3304 = vmatprep.subr.bf16.mxu0 0
    %3305 = vmatpush2.bf16.msra.mxu0 %v2230
    %3306 = vmatprep.mubr.bf16.mxu0 %v104
    %3307 = vmatmul.mubr.bf16.gmra.mxu0 %v103
    %v3308 = vpop.f32.mrf.mxu0
    %v3309 = vadd.f32 %v3268, %v3308
    %v3310 = vpop.f32.mrf.mxu0
    %v3311 = vpop.f32.mrf.mxu0
    %v3312 = vadd.f32 %v3271, %v3311
    %v3313 = vpop.f32.mrf.mxu0
    %3314 = vdwg.mxu0
    %3315 = vmatprep.subr.bf16.mxu0 0
    %3316 = vmatpush1.bf16.msra.mxu0 %v2275
    %3317 = vmatprep.subr.bf16.mxu0 0
    %3318 = vmatpush1.bf16.msra.mxu0 %v2272
    %3319 = vmatprep.subr.bf16.mxu0 0
    %3320 = vmatpush1.bf16.msra.mxu0 %v2269
    %3321 = vmatprep.subr.bf16.mxu0 0
    %3322 = vmatpush1.bf16.msra.mxu0 %v2266
    %3323 = vmatprep.subr.bf16.mxu0 0
    %3324 = vmatpush1.bf16.msra.mxu0 %v2263
    %3325 = vmatprep.subr.bf16.mxu0 0
    %3326 = vmatpush1.bf16.msra.mxu0 %v2260
    %3327 = vmatprep.subr.bf16.mxu0 0
    %3328 = vmatpush1.bf16.msra.mxu0 %v2257
    %3329 = vmatprep.subr.bf16.mxu0 0
    %3330 = vmatpush1.bf16.msra.mxu0 %v2254
    %3331 = vmatprep.subr.bf16.mxu0 0
    %3332 = vmatpush2.bf16.msra.mxu0 %v2299
    %3333 = vmatprep.subr.bf16.mxu0 0
    %3334 = vmatpush2.bf16.msra.mxu0 %v2296
    %3335 = vmatprep.subr.bf16.mxu0 0
    %3336 = vmatpush2.bf16.msra.mxu0 %v2293
    %3337 = vmatprep.subr.bf16.mxu0 0
    %3338 = vmatpush2.bf16.msra.mxu0 %v2290
    %3339 = vmatprep.subr.bf16.mxu0 0
    %3340 = vmatpush2.bf16.msra.mxu0 %v2287
    %3341 = vmatprep.subr.bf16.mxu0 0
    %3342 = vmatpush2.bf16.msra.mxu0 %v2284
    %3343 = vmatprep.subr.bf16.mxu0 0
    %3344 = vmatpush2.bf16.msra.mxu0 %v2281
    %3345 = vmatprep.subr.bf16.mxu0 0
    %3346 = vmatpush2.bf16.msra.mxu0 %v2278
    %3347 = vmatprep.mubr.bf16.mxu0 %v106
    %3348 = vmatmul.mubr.bf16.gmra.mxu0 %v105
    %v3349 = vpop.f32.mrf.mxu0
    %v3350 = vadd.f32 %v3309, %v3349
    %v3351 = vpop.f32.mrf.mxu0
    %v3352 = vpop.f32.mrf.mxu0
    %v3353 = vadd.f32 %v3312, %v3352
    %v3354 = vpop.f32.mrf.mxu0
    %3355 = vdwg.mxu0
    %v3356 = vmax.f32 %v3020, 0.0
    %v3357 = vmax.f32 %v3022, 0.0
    %v3358 = vmax.f32 %v3350, 0.0
    %v3359 = vmax.f32 %v3024, 0.0
    %v3360 = vmax.f32 %v3026, 0.0
    %v3361 = vmax.f32 %v3353, 0.0
    %v3362 = vld [vmem:[%s3] sm:$0x1f]
    %v3363 = vld [vmem:[%s3 + $0x8] sm:$0x1f]
    %v3364 = vld [vmem:[%s3 + $0x10] sm:$0x1f]
    %v3365 = vld [vmem:[#allocation7] sm:$0x7]
    %v3367 = vlaneseq
    %v3368 = vshrl.u32 %v3367, 7
    %v3369 = vsub.s32 0, %v3368
    %v3370 = vrot.slane %v3365, %v3369
    %v3371 = vlaneseq
    %v3372 = vshrl.u32 %v3371, 7
    %v3373 = vsub.s32 1, %v3372
    %v3374 = vrot.slane %v3365, %v3373
    %v3375 = vlaneseq
    %v3376 = vshrl.u32 %v3375, 7
    %v3377 = vsub.s32 2, %v3376
    %v3378 = vrot.slane %v3365, %v3377
    %v3382 = vmul.f32 %v3362, %v3370
    %v3383 = vmul.f32 %v3363, %v3374
    %v3384 = vmul.f32 %v3364, %v3378
    %v3385 = vpack.c.bf16 %v3382, %v3382
    %v3386 = vpack.c.bf16 %v3383, %v3383
    %v3387 = vpack.c.bf16 %v3384, %v3384
    %v3388 = vpack.c.bf16 %v3359, %v3356
    %v3389 = vpack.c.bf16 %v3360, %v3357
    %v3390 = vpack.c.bf16 %v3361, %v3358
    %3391 = vmatprep.subr.bf16.mxu0 0
    %3392 = vmatpush1.bf16.xpose.msra.mxu0 0
    %3393 = vmatprep.subr.bf16.mxu0 0
    %3394 = vmatpush1.bf16.xpose.msra.mxu0 0
    %3395 = vmatprep.subr.bf16.mxu0 0
    %3396 = vmatpush1.bf16.xpose.msra.mxu0 0
    %3397 = vmatprep.subr.bf16.mxu0 0
    %3398 = vmatpush1.bf16.xpose.msra.mxu0 0
    %3399 = vmatprep.subr.bf16.mxu0 0
    %3400 = vmatpush1.bf16.xpose.msra.mxu0 0
    %3401 = vmatprep.subr.bf16.mxu0 0
    %3402 = vmatpush1.bf16.xpose.msra.mxu0 0
    %3403 = vmatprep.subr.bf16.mxu0 0
    %3404 = vmatpush1.bf16.xpose.msra.mxu0 0
    %3405 = vmatprep.subr.bf16.mxu0 %v3389
    %3406 = vmatpush1.bf16.xpose.msra.mxu0 %v3388
    %3407 = vmatprep.subr.bf16.mxu0 0
    %3408 = vmatpush2.bf16.xpose.msra.mxu0 0
    %3409 = vmatprep.subr.bf16.mxu0 0
    %3410 = vmatpush2.bf16.xpose.msra.mxu0 0
    %3411 = vmatprep.subr.bf16.mxu0 0
    %3412 = vmatpush2.bf16.xpose.msra.mxu0 0
    %3413 = vmatprep.subr.bf16.mxu0 0
    %3414 = vmatpush2.bf16.xpose.msra.mxu0 0
    %3415 = vmatprep.subr.bf16.mxu0 0
    %3416 = vmatpush2.bf16.xpose.msra.mxu0 0
    %3417 = vmatprep.subr.bf16.mxu0 0
    %3418 = vmatpush2.bf16.xpose.msra.mxu0 0
    %3419 = vmatprep.subr.bf16.mxu0 0
    %3420 = vmatpush2.bf16.xpose.msra.mxu0 0
    %3421 = vmatprep.subr.bf16.mxu0 0
    %3422 = vmatpush2.bf16.xpose.msra.mxu0 0
    %3423 = vmatprep.mubr.bf16.mxu0 %v3386
    %3424 = vmatmul.mubr.bf16.gmra.mxu0 %v3385
    %v3425 = vpop.f32.mrf.mxu0
    %v3426 = vadd.f32 0.0, %v3425
    %v3427 = vpop.f32.mrf.mxu0
    %v3428 = vpop.f32.mrf.mxu0
    %v3429 = vpop.f32.mrf.mxu0
    %3430 = vdwg.mxu0
    %3431 = vmatprep.subr.bf16.mxu0 0
    %3432 = vmatpush1.bf16.xpose.msra.mxu0 0
    %3433 = vmatprep.subr.bf16.mxu0 0
    %3434 = vmatpush1.bf16.xpose.msra.mxu0 0
    %3435 = vmatprep.subr.bf16.mxu0 0
    %3436 = vmatpush1.bf16.xpose.msra.mxu0 0
    %3437 = vmatprep.subr.bf16.mxu0 0
    %3438 = vmatpush1.bf16.xpose.msra.mxu0 0
    %3439 = vmatprep.subr.bf16.mxu0 0
    %3440 = vmatpush1.bf16.xpose.msra.mxu0 0
    %3441 = vmatprep.subr.bf16.mxu0 0
    %3442 = vmatpush1.bf16.xpose.msra.mxu0 0
    %3443 = vmatprep.subr.bf16.mxu0 0
    %3444 = vmatpush1.bf16.xpose.msra.mxu0 0
    %3445 = vmatprep.subr.bf16.mxu0 0
    %3446 = vmatpush1.bf16.xpose.msra.mxu0 %v3390
    %3447 = vmatprep.subr.bf16.mxu0 0
    %3448 = vmatpush2.bf16.xpose.msra.mxu0 0
    %3449 = vmatprep.subr.bf16.mxu0 0
    %3450 = vmatpush2.bf16.xpose.msra.mxu0 0
    %3451 = vmatprep.subr.bf16.mxu0 0
    %3452 = vmatpush2.bf16.xpose.msra.mxu0 0
    %3453 = vmatprep.subr.bf16.mxu0 0
    %3454 = vmatpush2.bf16.xpose.msra.mxu0 0
    %3455 = vmatprep.subr.bf16.mxu0 0
    %3456 = vmatpush2.bf16.xpose.msra.mxu0 0
    %3457 = vmatprep.subr.bf16.mxu0 0
    %3458 = vmatpush2.bf16.xpose.msra.mxu0 0
    %3459 = vmatprep.subr.bf16.mxu0 0
    %3460 = vmatpush2.bf16.xpose.msra.mxu0 0
    %3461 = vmatprep.subr.bf16.mxu0 0
    %3462 = vmatpush2.bf16.xpose.msra.mxu0 0
    %3463 = vmatprep.mubr.bf16.mxu0 0
    %3464 = vmatmul.mubr.bf16.gmra.mxu0 %v3387
    %v3465 = vpop.f32.mrf.mxu0
    %v3466 = vadd.f32 %v3426, %v3465
    %v3467 = vpop.f32.mrf.mxu0
    %v3468 = vpop.f32.mrf.mxu0
    %v3469 = vpop.f32.mrf.mxu0
    %3470 = vdwg.mxu0
    %vm3471 = vcmask 126976
    %3472 = vst.msk [vmem:[#allocation8] sm:$0x1f] %vm3471, %v3466
    // Predicated region
    $region34: #{ltr_forward.1} parent=1 // pred_check
      _
    $region35: #{ltr_forward.1} parent=1 // pred_check_branch
      %3474 = sbr.rel (0) target = $region37
    $region36: #{ltr_forward.1} parent=1 // pred_region
      %s3476 = ssub.s32 128, 128
      %3477 = vsyncadd [#allocation4], %s3476
      %s3479 = sshll.u32 [#allocation8], 4
      %s3480 = int_to_ptr.vmem [resolvable:$true] %s3479
      %3482 = dma.vmem_to_hbm [thread:$0]  %s3480, 128, %s5, [#allocation4]
    $region37: #{ltr_forward.1} parent=1 // pred_fallthru
      _
    // Predicated region
    $region38: #{ltr_forward.1} parent=1 // pred_check
      _
    $region39: #{ltr_forward.1} parent=1 // pred_check_branch
      %3484 = sbr.rel (0) target = $region41
    $region40: #{ltr_forward.1} parent=1 // pred_region
      %3485 = dma.done [#allocation4], 128
    $region41: #{ltr_forward.1} parent=1 // pred_fallthru
      _
    %3486 = vsyncpa [#allocation3], 1
    %3487 = vsyncpa [#allocation6], 1
    %3488 = vsyncpa [#allocation4], 1

</llo_original>
